<compile_context>
chip_gen: v5e
topology: v5e:2x2
jax: 0.10.0
libtpu: 0.0.40
codegen_flags: <defaults>
</compile_context>

<pallas_src>
import functools

import numpy as np
import jax
import jax.numpy as jnp
from jax import lax
from jax.experimental import pallas as pl
from jax.experimental.pallas import tpu as pltpu

C_IN = 64
C_RED = C_IN // 16          # 4
KSIZE = 7
PAD = 3
OFF = 128                   # lane-aligned data offset inside the conv scratch


# ----------------------------- kernel helpers ---------------------------------
def _sigmoid(x):
    # tanh form: stays on the EUP slot and is overflow-free.
    return 0.5 * (jnp.tanh(0.5 * x) + 1.0)


def _channel_attention(x, mlp_ref, idx):
    """x: (64, HW) slice for one branch.  Returns the (64, 1) channel gate."""
    w1t = mlp_ref[:, 8 * idx:8 * idx + C_RED]                  # (64, 4) = fc1.W^T
    w2 = mlp_ref[:, 8 * idx + C_RED:8 * idx + 2 * C_RED]       # (64, 4) = fc2.W
    ch_max = jnp.max(x, axis=1, keepdims=True)                 # (64, 1)  lane reduce
    h = jnp.maximum(jnp.sum(w1t * ch_max, axis=0, keepdims=True), 0.0)   # (1, 4)
    logit = jnp.sum(w2 * h, axis=1, keepdims=True)             # (64, 1)
    return _sigmoid(logit)


def _spatial_attention(t, wslab, width, buf_ref):
    """t: (64, HWT) gated features; wslab(a) -> (7, HWT) tap weights with full
    2D validity folded in; width: spatial W.  Returns the (1, HWT) gate."""
    hwt = t.shape[1]
    sp = jnp.max(t, axis=0, keepdims=True)                     # (1, HWT) sublane reduce

    # Row b of buf[:, OFF:OFF+hwt] holds sp shifted by the tap column offset
    # (b - PAD).  Row PAD is sp itself; other rows are unaligned reloads of row
    # PAD written back with aligned stores.
    buf_ref[PAD:PAD + 1, OFF:OFF + hwt] = sp
    for b in range(KSIZE):
        if b == PAD:
            continue
        buf_ref[b:b + 1, OFF:OFF + hwt] = \
            buf_ref[PAD:PAD + 1, OFF + (b - PAD):OFF + (b - PAD) + hwt]

    # 7x7 conv = 7 sublane-batched FMAs (one per row offset a), 3 independent
    # accumulator chains, then one sublane reduce.
    accs = [None, None, None]
    for a in range(KSIZE):
        base = OFF + (a - PAD) * width
        slab = buf_ref[:, base:base + hwt]                     # (7, HWT)
        term = wslab(a) * slab
        k = a % 3
        accs[k] = term if accs[k] is None else accs[k] + term
    conv = jnp.sum(accs[0] + accs[1] + accs[2], axis=0, keepdims=True)  # (1, HWT)
    return _sigmoid(conv)


def _attention_kernel(width23, width45, half45,
                      x2_ref, x3_ref, x45_ref, mlp_ref, wc23_ref, wc45_ref,
                      o2_ref, o3_ref, o45_ref, buf_ref):
    """All 4 CBAM branches for one batch element per grid step."""
    # Clear the scratch once per step so never-written halo lanes are finite
    # (their conv weights are zero, but 0 * NaN would poison the sum).
    buf_ref[...] = jnp.zeros(buf_ref.shape, buf_ref.dtype)

    # ---- branches 2 and 3: one 16x16 map each (256 lanes, lane-dense) ----
    for bi, (x_ref, o_ref) in enumerate(((x2_ref, o2_ref), (x3_ref, o3_ref))):
        x = x_ref[...]                                         # (64, 256)
        ca = _channel_attention(x, mlp_ref, bi)                # (64, 1)
        t = x * ca
        sa = _spatial_attention(
            t, lambda a, _bi=bi: wc23_ref[_bi * KSIZE + a], width23, buf_ref)
        o_ref[...] = t * sa

    # ---- branches 4 and 5: two 8x8 maps lane-packed into one 128-lane block ----
    x = x45_ref[...]                                           # (64, 128)
    ca4 = _channel_attention(x[:, :half45], mlp_ref, 2)        # (64, 1)
    ca5 = _channel_attention(x[:, half45:], mlp_ref, 3)        # (64, 1)
    lane = lax.broadcasted_iota(jnp.int32, (1, x.shape[1]), 1)
    sel = (lane < half45).astype(jnp.float32)                  # (1, 128)
    ca = ca4 * sel + ca5 * (1.0 - sel)                         # (64, 128)
    t = x * ca
    sa = _spatial_attention(t, lambda a: wc45_ref[a], width45, buf_ref)
    o45_ref[...] = t * sa


# ----------------------------- wrapper ----------------------------------------
@jax.jit
def attention_forward(x2, x3, x4, x5, mlp_w, wc23, wc45):
    """Pallas implementation of Attention.forward(x2, x3, x4, x5) (NCHW f32)."""
    assert x2.shape == x3.shape and x4.shape == x5.shape
    B, C, H2, W2 = x2.shape
    _, _, H4, W4 = x4.shape
    assert C == C_IN
    hw2 = H2 * W2
    hw4 = H4 * W4
    hw45 = 2 * hw4
    max_hw = max(hw2, hw45)
    assert 3 * max(W2, W4) + PAD <= OFF

    # Free reshapes (no transpose): (B,C,H,W) -> (B,C,H*W); pack x4|x5 on lanes.
    x2f = x2.reshape(B, C, hw2)
    x3f = x3.reshape(B, C, hw2)
    x45 = jnp.concatenate([x4.reshape(B, C, hw4), x5.reshape(B, C, hw4)], axis=2)

    kernel = functools.partial(_attention_kernel, W2, W4, hw4)

    o2, o3, o45 = pl.pallas_call(
        kernel,
        out_shape=(jax.ShapeDtypeStruct((B, C, hw2), jnp.float32),
                   jax.ShapeDtypeStruct((B, C, hw2), jnp.float32),
                   jax.ShapeDtypeStruct((B, C, hw45), jnp.float32)),
        grid=(B,),
        in_specs=[
            pl.BlockSpec((None, C, hw2), lambda b: (b, 0, 0)),
            pl.BlockSpec((None, C, hw2), lambda b: (b, 0, 0)),
            pl.BlockSpec((None, C, hw45), lambda b: (b, 0, 0)),
            pl.BlockSpec((C, 8 * 4), lambda b: (0, 0)),
            pl.BlockSpec((2 * KSIZE, KSIZE, hw2), lambda b: (0, 0, 0)),
            pl.BlockSpec((KSIZE, KSIZE, hw45), lambda b: (0, 0, 0)),
        ],
        out_specs=(
            pl.BlockSpec((None, C, hw2), lambda b: (b, 0, 0)),
            pl.BlockSpec((None, C, hw2), lambda b: (b, 0, 0)),
            pl.BlockSpec((None, C, hw45), lambda b: (b, 0, 0)),
        ),
        scratch_shapes=[pltpu.VMEM((KSIZE, max_hw + 2 * OFF), jnp.float32)],
        compiler_params=pltpu.CompilerParams(
            dimension_semantics=("parallel",)),
    )(x2f, x3f, x45, mlp_w, wc23, wc45)

    return (o2.reshape(x2.shape),
            o3.reshape(x3.shape),
            o45[:, :, :hw4].reshape(x4.shape),
            o45[:, :, hw4:].reshape(x5.shape))


# ----------------------------- parameters -------------------------------------
def make_branch_params(key):
    """Random weights in PyTorch convention (Conv2d weights, squeezed)."""
    k1, k2, k3 = jax.random.split(key, 3)
    w_fc1 = 0.1 * jax.random.normal(k1, (C_RED, C_IN), jnp.float32)   # Conv2d(64->4, 1x1)
    w_fc2 = 0.1 * jax.random.normal(k2, (C_IN, C_RED), jnp.float32)   # Conv2d(4->64, 1x1)
    wsp = 0.1 * jax.random.normal(k3, (KSIZE, KSIZE), jnp.float32)    # Conv2d(1->1, 7x7)
    return (w_fc1, w_fc2, wsp)


def _fold_conv_weight(wsp, H, W, lane0, total_lanes):
    """(7, 7, total_lanes) per-position taps with FULL 2D validity folded in."""
    wsp = np.asarray(wsp, np.float32)
    out = np.zeros((KSIZE, KSIZE, total_lanes), np.float32)
    ii = np.arange(H * W) // W
    jj = np.arange(H * W) % W
    for a in range(KSIZE):
        for b in range(KSIZE):
            valid = ((ii + a - PAD >= 0) & (ii + a - PAD < H) &
                     (jj + b - PAD >= 0) & (jj + b - PAD < W))
            out[a, b, lane0:lane0 + H * W] = np.where(valid, wsp[a, b], 0.0)
    return out


def prepare_params(raw_params, shapes):
    """One-time fold of PyTorch-convention weights into kernel layouts."""
    (H2, W2), (H3, W3), (H4, W4), (H5, W5) = [(s[2], s[3]) for s in shapes]
    assert (H2, W2) == (H3, W3) and (H4, W4) == (H5, W5)
    hw2, hw4 = H2 * W2, H4 * W4

    mlp = np.zeros((C_IN, 8 * 4), np.float32)
    for i, (w_fc1, w_fc2, _) in enumerate(raw_params):
        mlp[:, 8 * i:8 * i + C_RED] = np.asarray(w_fc1).T          # fc1.W^T
        mlp[:, 8 * i + C_RED:8 * i + 2 * C_RED] = np.asarray(w_fc2)  # fc2.W

    wc23 = np.concatenate([
        _fold_conv_weight(raw_params[0][2], H2, W2, 0, hw2),
        _fold_conv_weight(raw_params[1][2], H3, W3, 0, hw2),
    ], axis=0)                                                     # (14, 7, hw2)
    wc45 = (_fold_conv_weight(raw_params[2][2], H4, W4, 0, 2 * hw4)
            + _fold_conv_weight(raw_params[3][2], H5, W5, hw4, 2 * hw4))
    return jnp.asarray(mlp), jnp.asarray(wc23), jnp.asarray(wc45)


# ------------------- pure-JAX reference (for checking) ------------------------
def _ref_branch(x, branch_params):
    w_fc1, w_fc2, wsp = branch_params
    mx = jnp.max(x, axis=(2, 3))                                       # (B, 64)
    h = jnp.maximum(
        jnp.einsum('rc,bc->br', w_fc1, mx, precision=lax.Precision.HIGHEST), 0.0)
    ca = jax.nn.sigmoid(
        jnp.einsum('cr,br->bc', w_fc2, h, precision=lax.Precision.HIGHEST))
    t = x * ca[:, :, None, None]
    sp = jnp.max(t, axis=1, keepdims=True)                             # (B, 1, H, W)
    conv = lax.conv_general_dilated(
        sp, wsp[None, None, :, :], window_strides=(1, 1),
        padding=((PAD, PAD), (PAD, PAD)),
        dimension_numbers=('NCHW', 'OIHW', 'NCHW'),
        precision=lax.Precision.HIGHEST)
    return t * jax.nn.sigmoid(conv)


# --------------------------------- main ---------------------------------------
if __name__ == "__main__":
    root = jax.random.PRNGKey(0)
    kp, kx = jax.random.split(root)

    # x2/x3 at 16x16, x4/x5 at 8x8 (channels must be 64, per the module).
    shapes = [(2, 64, 16, 16), (2, 64, 16, 16), (2, 64, 8, 8), (2, 64, 8, 8)]

    raw_params = [make_branch_params(k) for k in jax.random.split(kp, 4)]
    mlp_w, wc23, wc45 = prepare_params(raw_params, shapes)

    xs = tuple(jax.random.normal(k, s, jnp.float32)
               for k, s in zip(jax.random.split(kx, 4), shapes))

    outs = jax.block_until_ready(attention_forward(*xs, mlp_w, wc23, wc45))

    # Check against the pure-JAX reference.
    for x, p, o in zip(xs, raw_params, outs):
        ref = _ref_branch(x, p)
        assert o.shape == x.shape and o.dtype == jnp.float32
        err = float(jnp.max(jnp.abs(o - ref)))
        assert jnp.allclose(o, ref, rtol=1e-5, atol=1e-5), err

    print("KERNEL_OK")
</pallas_src>

<mosaic_0001>
module attributes {stable_mosaic.version = 11 : i64} {
  func.func @_attention_kernel(%arg0: i32, %arg1: memref<1x64x256xf32, #tpu.memory_space<vmem>>, %arg2: memref<1x64x256xf32, #tpu.memory_space<vmem>>, %arg3: memref<1x64x128xf32, #tpu.memory_space<vmem>>, %arg4: memref<64x32xf32, #tpu.memory_space<vmem>>, %arg5: memref<14x7x256xf32, #tpu.memory_space<vmem>>, %arg6: memref<7x7x128xf32, #tpu.memory_space<vmem>>, %arg7: memref<1x64x256xf32, #tpu.memory_space<vmem>>, %arg8: memref<1x64x256xf32, #tpu.memory_space<vmem>>, %arg9: memref<1x64x128xf32, #tpu.memory_space<vmem>>, %arg10: memref<7x512xf32, #tpu.memory_space<vmem>>) attributes {dimension_semantics = [#tpu.dimension_semantics<parallel>], iteration_bounds = array<i64: 2>, scalar_prefetch = 0 : i64, scratch_operands = 1 : i64, tpu.core_type = #tpu.core_type<tc>, window_params = [{transform_indices = @transform_0, window_bounds = array<i64: 1, 64, 256>}, {transform_indices = @transform_1, window_bounds = array<i64: 1, 64, 256>}, {transform_indices = @transform_2, window_bounds = array<i64: 1, 64, 128>}, {pipeline_mode = #tpu.pipeline_mode<synchronous>, transform_indices = @transform_3, window_bounds = array<i64: 64, 32>}, {pipeline_mode = #tpu.pipeline_mode<synchronous>, transform_indices = @transform_4, window_bounds = array<i64: 14, 7, 256>}, {pipeline_mode = #tpu.pipeline_mode<synchronous>, transform_indices = @transform_5, window_bounds = array<i64: 7, 7, 128>}, {transform_indices = @transform_6, window_bounds = array<i64: 1, 64, 256>}, {transform_indices = @transform_7, window_bounds = array<i64: 1, 64, 256>}, {transform_indices = @transform_8, window_bounds = array<i64: 1, 64, 128>}]} {
    %cst = arith.constant 0.000000e+00 : f32
    %0 = vector.broadcast %cst : f32 to vector<7x512xf32>
    %c0 = arith.constant 0 : index
    %c0_0 = arith.constant 0 : index
    %1 = vector.load %arg10[%c0, %c0_0] : memref<7x512xf32, #tpu.memory_space<vmem>>, vector<7x512xf32>
    tpu.vector_store %arg10[%c0, %c0_0], %0 {strides = array<i32>} : memref<7x512xf32, #tpu.memory_space<vmem>>, vector<7x512xf32>,
    %c0_1 = arith.constant 0 : index
    %c0_2 = arith.constant 0 : index
    %c0_3 = arith.constant 0 : index
    %2 = vector.load %arg1[%c0_1, %c0_2, %c0_3] : memref<1x64x256xf32, #tpu.memory_space<vmem>>, vector<1x64x256xf32>
    %3 = vector.shape_cast %2 : vector<1x64x256xf32> to vector<64x256xf32>
    %c0_4 = arith.constant 0 : index
    %c0_5 = arith.constant 0 : index
    %4 = vector.load %arg4[%c0_4, %c0_5] : memref<64x32xf32, #tpu.memory_space<vmem>>, vector<64x4xf32>
    %c0_6 = arith.constant 0 : index
    %c4 = arith.constant 4 : index
    %5 = vector.load %arg4[%c0_6, %c4] : memref<64x32xf32, #tpu.memory_space<vmem>>, vector<64x4xf32>
    %cst_7 = arith.constant dense<0xFF800000> : vector<64xf32>
    %6 = vector.multi_reduction <maximumf>, %3, %cst_7 [1] : vector<64x256xf32> to vector<64xf32>
    %7 = vector.shape_cast %6 : vector<64xf32> to vector<64x1xf32>
    %8 = vector.broadcast %7 : vector<64x1xf32> to vector<64x4xf32>
    %9 = arith.mulf %4, %8 : vector<64x4xf32>
    %cst_8 = arith.constant dense<0.000000e+00> : vector<4xf32>
    %10 = vector.multi_reduction <add>, %9, %cst_8 [0] : vector<64x4xf32> to vector<4xf32>
    %11 = vector.shape_cast %10 : vector<4xf32> to vector<1x4xf32>
    %cst_9 = arith.constant 0.000000e+00 : f32
    %12 = vector.broadcast %cst_9 : f32 to vector<1x4xf32>
    %13 = arith.maximumf %11, %12 : vector<1x4xf32>
    %14 = vector.broadcast %13 : vector<1x4xf32> to vector<64x4xf32>
    %15 = arith.mulf %5, %14 : vector<64x4xf32>
    %cst_10 = arith.constant dense<0.000000e+00> : vector<64xf32>
    %16 = vector.multi_reduction <add>, %15, %cst_10 [1] : vector<64x4xf32> to vector<64xf32>
    %17 = vector.shape_cast %16 : vector<64xf32> to vector<64x1xf32>
    %cst_11 = arith.constant 5.000000e-01 : f32
    %18 = vector.broadcast %cst_11 : f32 to vector<64x1xf32>
    %19 = arith.mulf %18, %17 : vector<64x1xf32>
    %20 = math.tanh %19 : vector<64x1xf32>
    %cst_12 = arith.constant 1.000000e+00 : f32
    %21 = vector.broadcast %cst_12 : f32 to vector<64x1xf32>
    %22 = arith.addf %20, %21 : vector<64x1xf32>
    %cst_13 = arith.constant 5.000000e-01 : f32
    %23 = vector.broadcast %cst_13 : f32 to vector<64x1xf32>
    %24 = arith.mulf %23, %22 : vector<64x1xf32>
    %25 = vector.broadcast %24 : vector<64x1xf32> to vector<64x256xf32>
    %26 = arith.mulf %3, %25 : vector<64x256xf32>
    %cst_14 = arith.constant dense<0xFF800000> : vector<256xf32>
    %27 = vector.multi_reduction <maximumf>, %26, %cst_14 [0] : vector<64x256xf32> to vector<256xf32>
    %28 = vector.shape_cast %27 : vector<256xf32> to vector<1x256xf32>
    %c3 = arith.constant 3 : index
    %c128 = arith.constant 128 : index
    %29 = vector.load %arg10[%c3, %c128] : memref<7x512xf32, #tpu.memory_space<vmem>>, vector<1x256xf32>
    tpu.vector_store %arg10[%c3, %c128], %28 {strides = array<i32>} : memref<7x512xf32, #tpu.memory_space<vmem>>, vector<1x256xf32>,
    %c3_15 = arith.constant 3 : index
    %c125 = arith.constant 125 : index
    %30 = vector.load %arg10[%c3_15, %c125] : memref<7x512xf32, #tpu.memory_space<vmem>>, vector<1x256xf32>
    %c0_16 = arith.constant 0 : index
    %c128_17 = arith.constant 128 : index
    %31 = vector.load %arg10[%c0_16, %c128_17] : memref<7x512xf32, #tpu.memory_space<vmem>>, vector<1x256xf32>
    tpu.vector_store %arg10[%c0_16, %c128_17], %30 {strides = array<i32>} : memref<7x512xf32, #tpu.memory_space<vmem>>, vector<1x256xf32>,
    %c3_18 = arith.constant 3 : index
    %c126 = arith.constant 126 : index
    %32 = vector.load %arg10[%c3_18, %c126] : memref<7x512xf32, #tpu.memory_space<vmem>>, vector<1x256xf32>
    %c1 = arith.constant 1 : index
    %c128_19 = arith.constant 128 : index
    %33 = vector.load %arg10[%c1, %c128_19] : memref<7x512xf32, #tpu.memory_space<vmem>>, vector<1x256xf32>
    tpu.vector_store %arg10[%c1, %c128_19], %32 {strides = array<i32>} : memref<7x512xf32, #tpu.memory_space<vmem>>, vector<1x256xf32>,
    %c3_20 = arith.constant 3 : index
    %c127 = arith.constant 127 : index
    %34 = vector.load %arg10[%c3_20, %c127] : memref<7x512xf32, #tpu.memory_space<vmem>>, vector<1x256xf32>
    %c2 = arith.constant 2 : index
    %c128_21 = arith.constant 128 : index
    %35 = vector.load %arg10[%c2, %c128_21] : memref<7x512xf32, #tpu.memory_space<vmem>>, vector<1x256xf32>
    tpu.vector_store %arg10[%c2, %c128_21], %34 {strides = array<i32>} : memref<7x512xf32, #tpu.memory_space<vmem>>, vector<1x256xf32>,
    %c3_22 = arith.constant 3 : index
    %c129 = arith.constant 129 : index
    %36 = vector.load %arg10[%c3_22, %c129] : memref<7x512xf32, #tpu.memory_space<vmem>>, vector<1x256xf32>
    %c4_23 = arith.constant 4 : index
    %c128_24 = arith.constant 128 : index
    %37 = vector.load %arg10[%c4_23, %c128_24] : memref<7x512xf32, #tpu.memory_space<vmem>>, vector<1x256xf32>
    tpu.vector_store %arg10[%c4_23, %c128_24], %36 {strides = array<i32>} : memref<7x512xf32, #tpu.memory_space<vmem>>, vector<1x256xf32>,
    %c3_25 = arith.constant 3 : index
    %c130 = arith.constant 130 : index
    %38 = vector.load %arg10[%c3_25, %c130] : memref<7x512xf32, #tpu.memory_space<vmem>>, vector<1x256xf32>
    %c5 = arith.constant 5 : index
    %c128_26 = arith.constant 128 : index
    %39 = vector.load %arg10[%c5, %c128_26] : memref<7x512xf32, #tpu.memory_space<vmem>>, vector<1x256xf32>
    tpu.vector_store %arg10[%c5, %c128_26], %38 {strides = array<i32>} : memref<7x512xf32, #tpu.memory_space<vmem>>, vector<1x256xf32>,
    %c3_27 = arith.constant 3 : index
    %c131 = arith.constant 131 : index
    %40 = vector.load %arg10[%c3_27, %c131] : memref<7x512xf32, #tpu.memory_space<vmem>>, vector<1x256xf32>
    %c6 = arith.constant 6 : index
    %c128_28 = arith.constant 128 : index
    %41 = vector.load %arg10[%c6, %c128_28] : memref<7x512xf32, #tpu.memory_space<vmem>>, vector<1x256xf32>
    tpu.vector_store %arg10[%c6, %c128_28], %40 {strides = array<i32>} : memref<7x512xf32, #tpu.memory_space<vmem>>, vector<1x256xf32>,
    %c0_29 = arith.constant 0 : index
    %c80 = arith.constant 80 : index
    %42 = vector.load %arg10[%c0_29, %c80] : memref<7x512xf32, #tpu.memory_space<vmem>>, vector<7x256xf32>
    %c0_30 = arith.constant 0 : index
    %c0_31 = arith.constant 0 : index
    %c0_32 = arith.constant 0 : index
    %43 = vector.load %arg5[%c0_30, %c0_31, %c0_32] : memref<14x7x256xf32, #tpu.memory_space<vmem>>, vector<1x7x256xf32>
    %44 = vector.shape_cast %43 : vector<1x7x256xf32> to vector<7x256xf32>
    %45 = arith.mulf %44, %42 : vector<7x256xf32>
    %c0_33 = arith.constant 0 : index
    %c96 = arith.constant 96 : index
    %46 = vector.load %arg10[%c0_33, %c96] : memref<7x512xf32, #tpu.memory_space<vmem>>, vector<7x256xf32>
    %c1_34 = arith.constant 1 : index
    %c0_35 = arith.constant 0 : index
    %c0_36 = arith.constant 0 : index
    %47 = vector.load %arg5[%c1_34, %c0_35, %c0_36] : memref<14x7x256xf32, #tpu.memory_space<vmem>>, vector<1x7x256xf32>
    %48 = vector.shape_cast %47 : vector<1x7x256xf32> to vector<7x256xf32>
    %49 = arith.mulf %48, %46 : vector<7x256xf32>
    %c0_37 = arith.constant 0 : index
    %c112 = arith.constant 112 : index
    %50 = vector.load %arg10[%c0_37, %c112] : memref<7x512xf32, #tpu.memory_space<vmem>>, vector<7x256xf32>
    %c2_38 = arith.constant 2 : index
    %c0_39 = arith.constant 0 : index
    %c0_40 = arith.constant 0 : index
    %51 = vector.load %arg5[%c2_38, %c0_39, %c0_40] : memref<14x7x256xf32, #tpu.memory_space<vmem>>, vector<1x7x256xf32>
    %52 = vector.shape_cast %51 : vector<1x7x256xf32> to vector<7x256xf32>
    %53 = arith.mulf %52, %50 : vector<7x256xf32>
    %c0_41 = arith.constant 0 : index
    %c128_42 = arith.constant 128 : index
    %54 = vector.load %arg10[%c0_41, %c128_42] : memref<7x512xf32, #tpu.memory_space<vmem>>, vector<7x256xf32>
    %c3_43 = arith.constant 3 : index
    %c0_44 = arith.constant 0 : index
    %c0_45 = arith.constant 0 : index
    %55 = vector.load %arg5[%c3_43, %c0_44, %c0_45] : memref<14x7x256xf32, #tpu.memory_space<vmem>>, vector<1x7x256xf32>
    %56 = vector.shape_cast %55 : vector<1x7x256xf32> to vector<7x256xf32>
    %57 = arith.mulf %56, %54 : vector<7x256xf32>
    %58 = arith.addf %45, %57 : vector<7x256xf32>
    %c0_46 = arith.constant 0 : index
    %c144 = arith.constant 144 : index
    %59 = vector.load %arg10[%c0_46, %c144] : memref<7x512xf32, #tpu.memory_space<vmem>>, vector<7x256xf32>
    %c4_47 = arith.constant 4 : index
    %c0_48 = arith.constant 0 : index
    %c0_49 = arith.constant 0 : index
    %60 = vector.load %arg5[%c4_47, %c0_48, %c0_49] : memref<14x7x256xf32, #tpu.memory_space<vmem>>, vector<1x7x256xf32>
    %61 = vector.shape_cast %60 : vector<1x7x256xf32> to vector<7x256xf32>
    %62 = arith.mulf %61, %59 : vector<7x256xf32>
    %63 = arith.addf %49, %62 : vector<7x256xf32>
    %c0_50 = arith.constant 0 : index
    %c160 = arith.constant 160 : index
    %64 = vector.load %arg10[%c0_50, %c160] : memref<7x512xf32, #tpu.memory_space<vmem>>, vector<7x256xf32>
    %c5_51 = arith.constant 5 : index
    %c0_52 = arith.constant 0 : index
    %c0_53 = arith.constant 0 : index
    %65 = vector.load %arg5[%c5_51, %c0_52, %c0_53] : memref<14x7x256xf32, #tpu.memory_space<vmem>>, vector<1x7x256xf32>
    %66 = vector.shape_cast %65 : vector<1x7x256xf32> to vector<7x256xf32>
    %67 = arith.mulf %66, %64 : vector<7x256xf32>
    %68 = arith.addf %53, %67 : vector<7x256xf32>
    %c0_54 = arith.constant 0 : index
    %c176 = arith.constant 176 : index
    %69 = vector.load %arg10[%c0_54, %c176] : memref<7x512xf32, #tpu.memory_space<vmem>>, vector<7x256xf32>
    %c6_55 = arith.constant 6 : index
    %c0_56 = arith.constant 0 : index
    %c0_57 = arith.constant 0 : index
    %70 = vector.load %arg5[%c6_55, %c0_56, %c0_57] : memref<14x7x256xf32, #tpu.memory_space<vmem>>, vector<1x7x256xf32>
    %71 = vector.shape_cast %70 : vector<1x7x256xf32> to vector<7x256xf32>
    %72 = arith.mulf %71, %69 : vector<7x256xf32>
    %73 = arith.addf %58, %72 : vector<7x256xf32>
    %74 = arith.addf %73, %63 : vector<7x256xf32>
    %75 = arith.addf %74, %68 : vector<7x256xf32>
    %cst_58 = arith.constant dense<0.000000e+00> : vector<256xf32>
    %76 = vector.multi_reduction <add>, %75, %cst_58 [0] : vector<7x256xf32> to vector<256xf32>
    %77 = vector.shape_cast %76 : vector<256xf32> to vector<1x256xf32>
    %cst_59 = arith.constant 5.000000e-01 : f32
    %78 = vector.broadcast %cst_59 : f32 to vector<1x256xf32>
    %79 = arith.mulf %78, %77 : vector<1x256xf32>
    %80 = math.tanh %79 : vector<1x256xf32>
    %cst_60 = arith.constant 1.000000e+00 : f32
    %81 = vector.broadcast %cst_60 : f32 to vector<1x256xf32>
    %82 = arith.addf %80, %81 : vector<1x256xf32>
    %cst_61 = arith.constant 5.000000e-01 : f32
    %83 = vector.broadcast %cst_61 : f32 to vector<1x256xf32>
    %84 = arith.mulf %83, %82 : vector<1x256xf32>
    %85 = vector.broadcast %84 : vector<1x256xf32> to vector<64x256xf32>
    %86 = arith.mulf %26, %85 : vector<64x256xf32>
    %c0_62 = arith.constant 0 : index
    %c0_63 = arith.constant 0 : index
    %c0_64 = arith.constant 0 : index
    %87 = vector.load %arg7[%c0_62, %c0_63, %c0_64] : memref<1x64x256xf32, #tpu.memory_space<vmem>>, vector<1x64x256xf32>
    %88 = vector.shape_cast %87 : vector<1x64x256xf32> to vector<64x256xf32>
    %89 = vector.shape_cast %86 : vector<64x256xf32> to vector<1x64x256xf32>
    tpu.vector_store %arg7[%c0_62, %c0_63, %c0_64], %89 {strides = array<i32>} : memref<1x64x256xf32, #tpu.memory_space<vmem>>, vector<1x64x256xf32>,
    %c0_65 = arith.constant 0 : index
    %c0_66 = arith.constant 0 : index
    %c0_67 = arith.constant 0 : index
    %90 = vector.load %arg2[%c0_65, %c0_66, %c0_67] : memref<1x64x256xf32, #tpu.memory_space<vmem>>, vector<1x64x256xf32>
    %91 = vector.shape_cast %90 : vector<1x64x256xf32> to vector<64x256xf32>
    %c0_68 = arith.constant 0 : index
    %c8 = arith.constant 8 : index
    %92 = vector.load %arg4[%c0_68, %c8] : memref<64x32xf32, #tpu.memory_space<vmem>>, vector<64x4xf32>
    %c0_69 = arith.constant 0 : index
    %c12 = arith.constant 12 : index
    %93 = vector.load %arg4[%c0_69, %c12] : memref<64x32xf32, #tpu.memory_space<vmem>>, vector<64x4xf32>
    %cst_70 = arith.constant dense<0xFF800000> : vector<64xf32>
    %94 = vector.multi_reduction <maximumf>, %91, %cst_70 [1] : vector<64x256xf32> to vector<64xf32>
    %95 = vector.shape_cast %94 : vector<64xf32> to vector<64x1xf32>
    %96 = vector.broadcast %95 : vector<64x1xf32> to vector<64x4xf32>
    %97 = arith.mulf %92, %96 : vector<64x4xf32>
    %cst_71 = arith.constant dense<0.000000e+00> : vector<4xf32>
    %98 = vector.multi_reduction <add>, %97, %cst_71 [0] : vector<64x4xf32> to vector<4xf32>
    %99 = vector.shape_cast %98 : vector<4xf32> to vector<1x4xf32>
    %cst_72 = arith.constant 0.000000e+00 : f32
    %100 = vector.broadcast %cst_72 : f32 to vector<1x4xf32>
    %101 = arith.maximumf %99, %100 : vector<1x4xf32>
    %102 = vector.broadcast %101 : vector<1x4xf32> to vector<64x4xf32>
    %103 = arith.mulf %93, %102 : vector<64x4xf32>
    %cst_73 = arith.constant dense<0.000000e+00> : vector<64xf32>
    %104 = vector.multi_reduction <add>, %103, %cst_73 [1] : vector<64x4xf32> to vector<64xf32>
    %105 = vector.shape_cast %104 : vector<64xf32> to vector<64x1xf32>
    %cst_74 = arith.constant 5.000000e-01 : f32
    %106 = vector.broadcast %cst_74 : f32 to vector<64x1xf32>
    %107 = arith.mulf %106, %105 : vector<64x1xf32>
    %108 = math.tanh %107 : vector<64x1xf32>
    %cst_75 = arith.constant 1.000000e+00 : f32
    %109 = vector.broadcast %cst_75 : f32 to vector<64x1xf32>
    %110 = arith.addf %108, %109 : vector<64x1xf32>
    %cst_76 = arith.constant 5.000000e-01 : f32
    %111 = vector.broadcast %cst_76 : f32 to vector<64x1xf32>
    %112 = arith.mulf %111, %110 : vector<64x1xf32>
    %113 = vector.broadcast %112 : vector<64x1xf32> to vector<64x256xf32>
    %114 = arith.mulf %91, %113 : vector<64x256xf32>
    %cst_77 = arith.constant dense<0xFF800000> : vector<256xf32>
    %115 = vector.multi_reduction <maximumf>, %114, %cst_77 [0] : vector<64x256xf32> to vector<256xf32>
    %116 = vector.shape_cast %115 : vector<256xf32> to vector<1x256xf32>
    %c3_78 = arith.constant 3 : index
    %c128_79 = arith.constant 128 : index
    %117 = vector.load %arg10[%c3_78, %c128_79] : memref<7x512xf32, #tpu.memory_space<vmem>>, vector<1x256xf32>
    tpu.vector_store %arg10[%c3_78, %c128_79], %116 {strides = array<i32>} : memref<7x512xf32, #tpu.memory_space<vmem>>, vector<1x256xf32>,
    %c3_80 = arith.constant 3 : index
    %c125_81 = arith.constant 125 : index
    %118 = vector.load %arg10[%c3_80, %c125_81] : memref<7x512xf32, #tpu.memory_space<vmem>>, vector<1x256xf32>
    %c0_82 = arith.constant 0 : index
    %c128_83 = arith.constant 128 : index
    %119 = vector.load %arg10[%c0_82, %c128_83] : memref<7x512xf32, #tpu.memory_space<vmem>>, vector<1x256xf32>
    tpu.vector_store %arg10[%c0_82, %c128_83], %118 {strides = array<i32>} : memref<7x512xf32, #tpu.memory_space<vmem>>, vector<1x256xf32>,
    %c3_84 = arith.constant 3 : index
    %c126_85 = arith.constant 126 : index
    %120 = vector.load %arg10[%c3_84, %c126_85] : memref<7x512xf32, #tpu.memory_space<vmem>>, vector<1x256xf32>
    %c1_86 = arith.constant 1 : index
    %c128_87 = arith.constant 128 : index
    %121 = vector.load %arg10[%c1_86, %c128_87] : memref<7x512xf32, #tpu.memory_space<vmem>>, vector<1x256xf32>
    tpu.vector_store %arg10[%c1_86, %c128_87], %120 {strides = array<i32>} : memref<7x512xf32, #tpu.memory_space<vmem>>, vector<1x256xf32>,
    %c3_88 = arith.constant 3 : index
    %c127_89 = arith.constant 127 : index
    %122 = vector.load %arg10[%c3_88, %c127_89] : memref<7x512xf32, #tpu.memory_space<vmem>>, vector<1x256xf32>
    %c2_90 = arith.constant 2 : index
    %c128_91 = arith.constant 128 : index
    %123 = vector.load %arg10[%c2_90, %c128_91] : memref<7x512xf32, #tpu.memory_space<vmem>>, vector<1x256xf32>
    tpu.vector_store %arg10[%c2_90, %c128_91], %122 {strides = array<i32>} : memref<7x512xf32, #tpu.memory_space<vmem>>, vector<1x256xf32>,
    %c3_92 = arith.constant 3 : index
    %c129_93 = arith.constant 129 : index
    %124 = vector.load %arg10[%c3_92, %c129_93] : memref<7x512xf32, #tpu.memory_space<vmem>>, vector<1x256xf32>
    %c4_94 = arith.constant 4 : index
    %c128_95 = arith.constant 128 : index
    %125 = vector.load %arg10[%c4_94, %c128_95] : memref<7x512xf32, #tpu.memory_space<vmem>>, vector<1x256xf32>
    tpu.vector_store %arg10[%c4_94, %c128_95], %124 {strides = array<i32>} : memref<7x512xf32, #tpu.memory_space<vmem>>, vector<1x256xf32>,
    %c3_96 = arith.constant 3 : index
    %c130_97 = arith.constant 130 : index
    %126 = vector.load %arg10[%c3_96, %c130_97] : memref<7x512xf32, #tpu.memory_space<vmem>>, vector<1x256xf32>
    %c5_98 = arith.constant 5 : index
    %c128_99 = arith.constant 128 : index
    %127 = vector.load %arg10[%c5_98, %c128_99] : memref<7x512xf32, #tpu.memory_space<vmem>>, vector<1x256xf32>
    tpu.vector_store %arg10[%c5_98, %c128_99], %126 {strides = array<i32>} : memref<7x512xf32, #tpu.memory_space<vmem>>, vector<1x256xf32>,
    %c3_100 = arith.constant 3 : index
    %c131_101 = arith.constant 131 : index
    %128 = vector.load %arg10[%c3_100, %c131_101] : memref<7x512xf32, #tpu.memory_space<vmem>>, vector<1x256xf32>
    %c6_102 = arith.constant 6 : index
    %c128_103 = arith.constant 128 : index
    %129 = vector.load %arg10[%c6_102, %c128_103] : memref<7x512xf32, #tpu.memory_space<vmem>>, vector<1x256xf32>
    tpu.vector_store %arg10[%c6_102, %c128_103], %128 {strides = array<i32>} : memref<7x512xf32, #tpu.memory_space<vmem>>, vector<1x256xf32>,
    %c0_104 = arith.constant 0 : index
    %c80_105 = arith.constant 80 : index
    %130 = vector.load %arg10[%c0_104, %c80_105] : memref<7x512xf32, #tpu.memory_space<vmem>>, vector<7x256xf32>
    %c7 = arith.constant 7 : index
    %c0_106 = arith.constant 0 : index
    %c0_107 = arith.constant 0 : index
    %131 = vector.load %arg5[%c7, %c0_106, %c0_107] : memref<14x7x256xf32, #tpu.memory_space<vmem>>, vector<1x7x256xf32>
    %132 = vector.shape_cast %131 : vector<1x7x256xf32> to vector<7x256xf32>
    %133 = arith.mulf %132, %130 : vector<7x256xf32>
    %c0_108 = arith.constant 0 : index
    %c96_109 = arith.constant 96 : index
    %134 = vector.load %arg10[%c0_108, %c96_109] : memref<7x512xf32, #tpu.memory_space<vmem>>, vector<7x256xf32>
    %c8_110 = arith.constant 8 : index
    %c0_111 = arith.constant 0 : index
    %c0_112 = arith.constant 0 : index
    %135 = vector.load %arg5[%c8_110, %c0_111, %c0_112] : memref<14x7x256xf32, #tpu.memory_space<vmem>>, vector<1x7x256xf32>
    %136 = vector.shape_cast %135 : vector<1x7x256xf32> to vector<7x256xf32>
    %137 = arith.mulf %136, %134 : vector<7x256xf32>
    %c0_113 = arith.constant 0 : index
    %c112_114 = arith.constant 112 : index
    %138 = vector.load %arg10[%c0_113, %c112_114] : memref<7x512xf32, #tpu.memory_space<vmem>>, vector<7x256xf32>
    %c9 = arith.constant 9 : index
    %c0_115 = arith.constant 0 : index
    %c0_116 = arith.constant 0 : index
    %139 = vector.load %arg5[%c9, %c0_115, %c0_116] : memref<14x7x256xf32, #tpu.memory_space<vmem>>, vector<1x7x256xf32>
    %140 = vector.shape_cast %139 : vector<1x7x256xf32> to vector<7x256xf32>
    %141 = arith.mulf %140, %138 : vector<7x256xf32>
    %c0_117 = arith.constant 0 : index
    %c128_118 = arith.constant 128 : index
    %142 = vector.load %arg10[%c0_117, %c128_118] : memref<7x512xf32, #tpu.memory_space<vmem>>, vector<7x256xf32>
    %c10 = arith.constant 10 : index
    %c0_119 = arith.constant 0 : index
    %c0_120 = arith.constant 0 : index
    %143 = vector.load %arg5[%c10, %c0_119, %c0_120] : memref<14x7x256xf32, #tpu.memory_space<vmem>>, vector<1x7x256xf32>
    %144 = vector.shape_cast %143 : vector<1x7x256xf32> to vector<7x256xf32>
    %145 = arith.mulf %144, %142 : vector<7x256xf32>
    %146 = arith.addf %133, %145 : vector<7x256xf32>
    %c0_121 = arith.constant 0 : index
    %c144_122 = arith.constant 144 : index
    %147 = vector.load %arg10[%c0_121, %c144_122] : memref<7x512xf32, #tpu.memory_space<vmem>>, vector<7x256xf32>
    %c11 = arith.constant 11 : index
    %c0_123 = arith.constant 0 : index
    %c0_124 = arith.constant 0 : index
    %148 = vector.load %arg5[%c11, %c0_123, %c0_124] : memref<14x7x256xf32, #tpu.memory_space<vmem>>, vector<1x7x256xf32>
    %149 = vector.shape_cast %148 : vector<1x7x256xf32> to vector<7x256xf32>
    %150 = arith.mulf %149, %147 : vector<7x256xf32>
    %151 = arith.addf %137, %150 : vector<7x256xf32>
    %c0_125 = arith.constant 0 : index
    %c160_126 = arith.constant 160 : index
    %152 = vector.load %arg10[%c0_125, %c160_126] : memref<7x512xf32, #tpu.memory_space<vmem>>, vector<7x256xf32>
    %c12_127 = arith.constant 12 : index
    %c0_128 = arith.constant 0 : index
    %c0_129 = arith.constant 0 : index
    %153 = vector.load %arg5[%c12_127, %c0_128, %c0_129] : memref<14x7x256xf32, #tpu.memory_space<vmem>>, vector<1x7x256xf32>
    %154 = vector.shape_cast %153 : vector<1x7x256xf32> to vector<7x256xf32>
    %155 = arith.mulf %154, %152 : vector<7x256xf32>
    %156 = arith.addf %141, %155 : vector<7x256xf32>
    %c0_130 = arith.constant 0 : index
    %c176_131 = arith.constant 176 : index
    %157 = vector.load %arg10[%c0_130, %c176_131] : memref<7x512xf32, #tpu.memory_space<vmem>>, vector<7x256xf32>
    %c13 = arith.constant 13 : index
    %c0_132 = arith.constant 0 : index
    %c0_133 = arith.constant 0 : index
    %158 = vector.load %arg5[%c13, %c0_132, %c0_133] : memref<14x7x256xf32, #tpu.memory_space<vmem>>, vector<1x7x256xf32>
    %159 = vector.shape_cast %158 : vector<1x7x256xf32> to vector<7x256xf32>
    %160 = arith.mulf %159, %157 : vector<7x256xf32>
    %161 = arith.addf %146, %160 : vector<7x256xf32>
    %162 = arith.addf %161, %151 : vector<7x256xf32>
    %163 = arith.addf %162, %156 : vector<7x256xf32>
    %cst_134 = arith.constant dense<0.000000e+00> : vector<256xf32>
    %164 = vector.multi_reduction <add>, %163, %cst_134 [0] : vector<7x256xf32> to vector<256xf32>
    %165 = vector.shape_cast %164 : vector<256xf32> to vector<1x256xf32>
    %cst_135 = arith.constant 5.000000e-01 : f32
    %166 = vector.broadcast %cst_135 : f32 to vector<1x256xf32>
    %167 = arith.mulf %166, %165 : vector<1x256xf32>
    %168 = math.tanh %167 : vector<1x256xf32>
    %cst_136 = arith.constant 1.000000e+00 : f32
    %169 = vector.broadcast %cst_136 : f32 to vector<1x256xf32>
    %170 = arith.addf %168, %169 : vector<1x256xf32>
    %cst_137 = arith.constant 5.000000e-01 : f32
    %171 = vector.broadcast %cst_137 : f32 to vector<1x256xf32>
    %172 = arith.mulf %171, %170 : vector<1x256xf32>
    %173 = vector.broadcast %172 : vector<1x256xf32> to vector<64x256xf32>
    %174 = arith.mulf %114, %173 : vector<64x256xf32>
    %c0_138 = arith.constant 0 : index
    %c0_139 = arith.constant 0 : index
    %c0_140 = arith.constant 0 : index
    %175 = vector.load %arg8[%c0_138, %c0_139, %c0_140] : memref<1x64x256xf32, #tpu.memory_space<vmem>>, vector<1x64x256xf32>
    %176 = vector.shape_cast %175 : vector<1x64x256xf32> to vector<64x256xf32>
    %177 = vector.shape_cast %174 : vector<64x256xf32> to vector<1x64x256xf32>
    tpu.vector_store %arg8[%c0_138, %c0_139, %c0_140], %177 {strides = array<i32>} : memref<1x64x256xf32, #tpu.memory_space<vmem>>, vector<1x64x256xf32>,
    %c0_141 = arith.constant 0 : index
    %c0_142 = arith.constant 0 : index
    %c0_143 = arith.constant 0 : index
    %178 = vector.load %arg3[%c0_141, %c0_142, %c0_143] : memref<1x64x128xf32, #tpu.memory_space<vmem>>, vector<1x64x128xf32>
    %179 = vector.shape_cast %178 : vector<1x64x128xf32> to vector<64x128xf32>
    %180 = vector.extract_strided_slice %179 {offsets = [0, 0], sizes = [64, 64], strides = [1, 1]} : vector<64x128xf32> to vector<64x64xf32>
    %c0_144 = arith.constant 0 : index
    %c16 = arith.constant 16 : index
    %181 = vector.load %arg4[%c0_144, %c16] : memref<64x32xf32, #tpu.memory_space<vmem>>, vector<64x4xf32>
    %c0_145 = arith.constant 0 : index
    %c20 = arith.constant 20 : index
    %182 = vector.load %arg4[%c0_145, %c20] : memref<64x32xf32, #tpu.memory_space<vmem>>, vector<64x4xf32>
    %cst_146 = arith.constant dense<0xFF800000> : vector<64xf32>
    %183 = vector.multi_reduction <maximumf>, %180, %cst_146 [1] : vector<64x64xf32> to vector<64xf32>
    %184 = vector.shape_cast %183 : vector<64xf32> to vector<64x1xf32>
    %185 = vector.broadcast %184 : vector<64x1xf32> to vector<64x4xf32>
    %186 = arith.mulf %181, %185 : vector<64x4xf32>
    %cst_147 = arith.constant dense<0.000000e+00> : vector<4xf32>
    %187 = vector.multi_reduction <add>, %186, %cst_147 [0] : vector<64x4xf32> to vector<4xf32>
    %188 = vector.shape_cast %187 : vector<4xf32> to vector<1x4xf32>
    %cst_148 = arith.constant 0.000000e+00 : f32
    %189 = vector.broadcast %cst_148 : f32 to vector<1x4xf32>
    %190 = arith.maximumf %188, %189 : vector<1x4xf32>
    %191 = vector.broadcast %190 : vector<1x4xf32> to vector<64x4xf32>
    %192 = arith.mulf %182, %191 : vector<64x4xf32>
    %cst_149 = arith.constant dense<0.000000e+00> : vector<64xf32>
    %193 = vector.multi_reduction <add>, %192, %cst_149 [1] : vector<64x4xf32> to vector<64xf32>
    %194 = vector.shape_cast %193 : vector<64xf32> to vector<64x1xf32>
    %cst_150 = arith.constant 5.000000e-01 : f32
    %195 = vector.broadcast %cst_150 : f32 to vector<64x1xf32>
    %196 = arith.mulf %195, %194 : vector<64x1xf32>
    %197 = math.tanh %196 : vector<64x1xf32>
    %cst_151 = arith.constant 1.000000e+00 : f32
    %198 = vector.broadcast %cst_151 : f32 to vector<64x1xf32>
    %199 = arith.addf %197, %198 : vector<64x1xf32>
    %cst_152 = arith.constant 5.000000e-01 : f32
    %200 = vector.broadcast %cst_152 : f32 to vector<64x1xf32>
    %201 = arith.mulf %200, %199 : vector<64x1xf32>
    %202 = vector.extract_strided_slice %179 {offsets = [0, 64], sizes = [64, 64], strides = [1, 1]} : vector<64x128xf32> to vector<64x64xf32>
    %c0_153 = arith.constant 0 : index
    %c24 = arith.constant 24 : index
    %203 = vector.load %arg4[%c0_153, %c24] : memref<64x32xf32, #tpu.memory_space<vmem>>, vector<64x4xf32>
    %c0_154 = arith.constant 0 : index
    %c28 = arith.constant 28 : index
    %204 = vector.load %arg4[%c0_154, %c28] : memref<64x32xf32, #tpu.memory_space<vmem>>, vector<64x4xf32>
    %cst_155 = arith.constant dense<0xFF800000> : vector<64xf32>
    %205 = vector.multi_reduction <maximumf>, %202, %cst_155 [1] : vector<64x64xf32> to vector<64xf32>
    %206 = vector.shape_cast %205 : vector<64xf32> to vector<64x1xf32>
    %207 = vector.broadcast %206 : vector<64x1xf32> to vector<64x4xf32>
    %208 = arith.mulf %203, %207 : vector<64x4xf32>
    %cst_156 = arith.constant dense<0.000000e+00> : vector<4xf32>
    %209 = vector.multi_reduction <add>, %208, %cst_156 [0] : vector<64x4xf32> to vector<4xf32>
    %210 = vector.shape_cast %209 : vector<4xf32> to vector<1x4xf32>
    %cst_157 = arith.constant 0.000000e+00 : f32
    %211 = vector.broadcast %cst_157 : f32 to vector<1x4xf32>
    %212 = arith.maximumf %210, %211 : vector<1x4xf32>
    %213 = vector.broadcast %212 : vector<1x4xf32> to vector<64x4xf32>
    %214 = arith.mulf %204, %213 : vector<64x4xf32>
    %cst_158 = arith.constant dense<0.000000e+00> : vector<64xf32>
    %215 = vector.multi_reduction <add>, %214, %cst_158 [1] : vector<64x4xf32> to vector<64xf32>
    %216 = vector.shape_cast %215 : vector<64xf32> to vector<64x1xf32>
    %cst_159 = arith.constant 5.000000e-01 : f32
    %217 = vector.broadcast %cst_159 : f32 to vector<64x1xf32>
    %218 = arith.mulf %217, %216 : vector<64x1xf32>
    %219 = math.tanh %218 : vector<64x1xf32>
    %cst_160 = arith.constant 1.000000e+00 : f32
    %220 = vector.broadcast %cst_160 : f32 to vector<64x1xf32>
    %221 = arith.addf %219, %220 : vector<64x1xf32>
    %cst_161 = arith.constant 5.000000e-01 : f32
    %222 = vector.broadcast %cst_161 : f32 to vector<64x1xf32>
    %223 = arith.mulf %222, %221 : vector<64x1xf32>
    %224 = tpu.iota {dimensions = array<i32: 1>} : vector<1x128xi32>
    %c64_i32 = arith.constant 64 : i32
    %225 = vector.broadcast %c64_i32 : i32 to vector<1x128xi32>
    %226 = arith.cmpi slt, %224, %225 : vector<1x128xi32>
    %227 = arith.extui %226 : vector<1x128xi1> to vector<1x128xi32>
    %228 = arith.sitofp %227 : vector<1x128xi32> to vector<1x128xf32>
    %229 = vector.broadcast %201 : vector<64x1xf32> to vector<64x128xf32>
    %230 = vector.broadcast %228 : vector<1x128xf32> to vector<64x128xf32>
    %231 = arith.mulf %229, %230 : vector<64x128xf32>
    %cst_162 = arith.constant 1.000000e+00 : f32
    %232 = vector.broadcast %cst_162 : f32 to vector<1x128xf32>
    %233 = arith.subf %232, %228 : vector<1x128xf32>
    %234 = vector.broadcast %223 : vector<64x1xf32> to vector<64x128xf32>
    %235 = vector.broadcast %233 : vector<1x128xf32> to vector<64x128xf32>
    %236 = arith.mulf %234, %235 : vector<64x128xf32>
    %237 = arith.addf %231, %236 : vector<64x128xf32>
    %238 = arith.mulf %179, %237 : vector<64x128xf32>
    %cst_163 = arith.constant dense<0xFF800000> : vector<128xf32>
    %239 = vector.multi_reduction <maximumf>, %238, %cst_163 [0] : vector<64x128xf32> to vector<128xf32>
    %240 = vector.shape_cast %239 : vector<128xf32> to vector<1x128xf32>
    %c3_164 = arith.constant 3 : index
    %c128_165 = arith.constant 128 : index
    %241 = vector.load %arg10[%c3_164, %c128_165] : memref<7x512xf32, #tpu.memory_space<vmem>>, vector<1x128xf32>
    tpu.vector_store %arg10[%c3_164, %c128_165], %240 {strides = array<i32>} : memref<7x512xf32, #tpu.memory_space<vmem>>, vector<1x128xf32>,
    %c3_166 = arith.constant 3 : index
    %c125_167 = arith.constant 125 : index
    %242 = vector.load %arg10[%c3_166, %c125_167] : memref<7x512xf32, #tpu.memory_space<vmem>>, vector<1x128xf32>
    %c0_168 = arith.constant 0 : index
    %c128_169 = arith.constant 128 : index
    %243 = vector.load %arg10[%c0_168, %c128_169] : memref<7x512xf32, #tpu.memory_space<vmem>>, vector<1x128xf32>
    tpu.vector_store %arg10[%c0_168, %c128_169], %242 {strides = array<i32>} : memref<7x512xf32, #tpu.memory_space<vmem>>, vector<1x128xf32>,
    %c3_170 = arith.constant 3 : index
    %c126_171 = arith.constant 126 : index
    %244 = vector.load %arg10[%c3_170, %c126_171] : memref<7x512xf32, #tpu.memory_space<vmem>>, vector<1x128xf32>
    %c1_172 = arith.constant 1 : index
    %c128_173 = arith.constant 128 : index
    %245 = vector.load %arg10[%c1_172, %c128_173] : memref<7x512xf32, #tpu.memory_space<vmem>>, vector<1x128xf32>
    tpu.vector_store %arg10[%c1_172, %c128_173], %244 {strides = array<i32>} : memref<7x512xf32, #tpu.memory_space<vmem>>, vector<1x128xf32>,
    %c3_174 = arith.constant 3 : index
    %c127_175 = arith.constant 127 : index
    %246 = vector.load %arg10[%c3_174, %c127_175] : memref<7x512xf32, #tpu.memory_space<vmem>>, vector<1x128xf32>
    %c2_176 = arith.constant 2 : index
    %c128_177 = arith.constant 128 : index
    %247 = vector.load %arg10[%c2_176, %c128_177] : memref<7x512xf32, #tpu.memory_space<vmem>>, vector<1x128xf32>
    tpu.vector_store %arg10[%c2_176, %c128_177], %246 {strides = array<i32>} : memref<7x512xf32, #tpu.memory_space<vmem>>, vector<1x128xf32>,
    %c3_178 = arith.constant 3 : index
    %c129_179 = arith.constant 129 : index
    %248 = vector.load %arg10[%c3_178, %c129_179] : memref<7x512xf32, #tpu.memory_space<vmem>>, vector<1x128xf32>
    %c4_180 = arith.constant 4 : index
    %c128_181 = arith.constant 128 : index
    %249 = vector.load %arg10[%c4_180, %c128_181] : memref<7x512xf32, #tpu.memory_space<vmem>>, vector<1x128xf32>
    tpu.vector_store %arg10[%c4_180, %c128_181], %248 {strides = array<i32>} : memref<7x512xf32, #tpu.memory_space<vmem>>, vector<1x128xf32>,
    %c3_182 = arith.constant 3 : index
    %c130_183 = arith.constant 130 : index
    %250 = vector.load %arg10[%c3_182, %c130_183] : memref<7x512xf32, #tpu.memory_space<vmem>>, vector<1x128xf32>
    %c5_184 = arith.constant 5 : index
    %c128_185 = arith.constant 128 : index
    %251 = vector.load %arg10[%c5_184, %c128_185] : memref<7x512xf32, #tpu.memory_space<vmem>>, vector<1x128xf32>
    tpu.vector_store %arg10[%c5_184, %c128_185], %250 {strides = array<i32>} : memref<7x512xf32, #tpu.memory_space<vmem>>, vector<1x128xf32>,
    %c3_186 = arith.constant 3 : index
    %c131_187 = arith.constant 131 : index
    %252 = vector.load %arg10[%c3_186, %c131_187] : memref<7x512xf32, #tpu.memory_space<vmem>>, vector<1x128xf32>
    %c6_188 = arith.constant 6 : index
    %c128_189 = arith.constant 128 : index
    %253 = vector.load %arg10[%c6_188, %c128_189] : memref<7x512xf32, #tpu.memory_space<vmem>>, vector<1x128xf32>
    tpu.vector_store %arg10[%c6_188, %c128_189], %252 {strides = array<i32>} : memref<7x512xf32, #tpu.memory_space<vmem>>, vector<1x128xf32>,
    %c0_190 = arith.constant 0 : index
    %c104 = arith.constant 104 : index
    %254 = vector.load %arg10[%c0_190, %c104] : memref<7x512xf32, #tpu.memory_space<vmem>>, vector<7x128xf32>
    %c0_191 = arith.constant 0 : index
    %c0_192 = arith.constant 0 : index
    %c0_193 = arith.constant 0 : index
    %255 = vector.load %arg6[%c0_191, %c0_192, %c0_193] : memref<7x7x128xf32, #tpu.memory_space<vmem>>, vector<1x7x128xf32>
    %256 = vector.shape_cast %255 : vector<1x7x128xf32> to vector<7x128xf32>
    %257 = arith.mulf %256, %254 : vector<7x128xf32>
    %c0_194 = arith.constant 0 : index
    %c112_195 = arith.constant 112 : index
    %258 = vector.load %arg10[%c0_194, %c112_195] : memref<7x512xf32, #tpu.memory_space<vmem>>, vector<7x128xf32>
    %c1_196 = arith.constant 1 : index
    %c0_197 = arith.constant 0 : index
    %c0_198 = arith.constant 0 : index
    %259 = vector.load %arg6[%c1_196, %c0_197, %c0_198] : memref<7x7x128xf32, #tpu.memory_space<vmem>>, vector<1x7x128xf32>
    %260 = vector.shape_cast %259 : vector<1x7x128xf32> to vector<7x128xf32>
    %261 = arith.mulf %260, %258 : vector<7x128xf32>
    %c0_199 = arith.constant 0 : index
    %c120 = arith.constant 120 : index
    %262 = vector.load %arg10[%c0_199, %c120] : memref<7x512xf32, #tpu.memory_space<vmem>>, vector<7x128xf32>
    %c2_200 = arith.constant 2 : index
    %c0_201 = arith.constant 0 : index
    %c0_202 = arith.constant 0 : index
    %263 = vector.load %arg6[%c2_200, %c0_201, %c0_202] : memref<7x7x128xf32, #tpu.memory_space<vmem>>, vector<1x7x128xf32>
    %264 = vector.shape_cast %263 : vector<1x7x128xf32> to vector<7x128xf32>
    %265 = arith.mulf %264, %262 : vector<7x128xf32>
    %c0_203 = arith.constant 0 : index
    %c128_204 = arith.constant 128 : index
    %266 = vector.load %arg10[%c0_203, %c128_204] : memref<7x512xf32, #tpu.memory_space<vmem>>, vector<7x128xf32>
    %c3_205 = arith.constant 3 : index
    %c0_206 = arith.constant 0 : index
    %c0_207 = arith.constant 0 : index
    %267 = vector.load %arg6[%c3_205, %c0_206, %c0_207] : memref<7x7x128xf32, #tpu.memory_space<vmem>>, vector<1x7x128xf32>
    %268 = vector.shape_cast %267 : vector<1x7x128xf32> to vector<7x128xf32>
    %269 = arith.mulf %268, %266 : vector<7x128xf32>
    %270 = arith.addf %257, %269 : vector<7x128xf32>
    %c0_208 = arith.constant 0 : index
    %c136 = arith.constant 136 : index
    %271 = vector.load %arg10[%c0_208, %c136] : memref<7x512xf32, #tpu.memory_space<vmem>>, vector<7x128xf32>
    %c4_209 = arith.constant 4 : index
    %c0_210 = arith.constant 0 : index
    %c0_211 = arith.constant 0 : index
    %272 = vector.load %arg6[%c4_209, %c0_210, %c0_211] : memref<7x7x128xf32, #tpu.memory_space<vmem>>, vector<1x7x128xf32>
    %273 = vector.shape_cast %272 : vector<1x7x128xf32> to vector<7x128xf32>
    %274 = arith.mulf %273, %271 : vector<7x128xf32>
    %275 = arith.addf %261, %274 : vector<7x128xf32>
    %c0_212 = arith.constant 0 : index
    %c144_213 = arith.constant 144 : index
    %276 = vector.load %arg10[%c0_212, %c144_213] : memref<7x512xf32, #tpu.memory_space<vmem>>, vector<7x128xf32>
    %c5_214 = arith.constant 5 : index
    %c0_215 = arith.constant 0 : index
    %c0_216 = arith.constant 0 : index
    %277 = vector.load %arg6[%c5_214, %c0_215, %c0_216] : memref<7x7x128xf32, #tpu.memory_space<vmem>>, vector<1x7x128xf32>
    %278 = vector.shape_cast %277 : vector<1x7x128xf32> to vector<7x128xf32>
    %279 = arith.mulf %278, %276 : vector<7x128xf32>
    %280 = arith.addf %265, %279 : vector<7x128xf32>
    %c0_217 = arith.constant 0 : index
    %c152 = arith.constant 152 : index
    %281 = vector.load %arg10[%c0_217, %c152] : memref<7x512xf32, #tpu.memory_space<vmem>>, vector<7x128xf32>
    %c6_218 = arith.constant 6 : index
    %c0_219 = arith.constant 0 : index
    %c0_220 = arith.constant 0 : index
    %282 = vector.load %arg6[%c6_218, %c0_219, %c0_220] : memref<7x7x128xf32, #tpu.memory_space<vmem>>, vector<1x7x128xf32>
    %283 = vector.shape_cast %282 : vector<1x7x128xf32> to vector<7x128xf32>
    %284 = arith.mulf %283, %281 : vector<7x128xf32>
    %285 = arith.addf %270, %284 : vector<7x128xf32>
    %286 = arith.addf %285, %275 : vector<7x128xf32>
    %287 = arith.addf %286, %280 : vector<7x128xf32>
    %cst_221 = arith.constant dense<0.000000e+00> : vector<128xf32>
    %288 = vector.multi_reduction <add>, %287, %cst_221 [0] : vector<7x128xf32> to vector<128xf32>
    %289 = vector.shape_cast %288 : vector<128xf32> to vector<1x128xf32>
    %cst_222 = arith.constant 5.000000e-01 : f32
    %290 = vector.broadcast %cst_222 : f32 to vector<1x128xf32>
    %291 = arith.mulf %290, %289 : vector<1x128xf32>
    %292 = math.tanh %291 : vector<1x128xf32>
    %cst_223 = arith.constant 1.000000e+00 : f32
    %293 = vector.broadcast %cst_223 : f32 to vector<1x128xf32>
    %294 = arith.addf %292, %293 : vector<1x128xf32>
    %cst_224 = arith.constant 5.000000e-01 : f32
    %295 = vector.broadcast %cst_224 : f32 to vector<1x128xf32>
    %296 = arith.mulf %295, %294 : vector<1x128xf32>
    %297 = vector.broadcast %296 : vector<1x128xf32> to vector<64x128xf32>
    %298 = arith.mulf %238, %297 : vector<64x128xf32>
    %c0_225 = arith.constant 0 : index
    %c0_226 = arith.constant 0 : index
    %c0_227 = arith.constant 0 : index
    %299 = vector.load %arg9[%c0_225, %c0_226, %c0_227] : memref<1x64x128xf32, #tpu.memory_space<vmem>>, vector<1x64x128xf32>
    %300 = vector.shape_cast %299 : vector<1x64x128xf32> to vector<64x128xf32>
    %301 = vector.shape_cast %298 : vector<64x128xf32> to vector<1x64x128xf32>
    tpu.vector_store %arg9[%c0_225, %c0_226, %c0_227], %301 {strides = array<i32>} : memref<1x64x128xf32, #tpu.memory_space<vmem>>, vector<1x64x128xf32>,
    return
  }
  func.func @transform_0(%arg0: i32) -> (i32, i32, i32) {
    %c0_i32 = arith.constant 0 : i32
    %c0_i32_0 = arith.constant 0 : i32
    %c0_i32_1 = arith.constant 0 : i32
    return %arg0, %c0_i32, %c0_i32_0 : i32, i32, i32
  }
  func.func @transform_1(%arg0: i32) -> (i32, i32, i32) {
    %c0_i32 = arith.constant 0 : i32
    %c0_i32_0 = arith.constant 0 : i32
    %c0_i32_1 = arith.constant 0 : i32
    return %arg0, %c0_i32, %c0_i32_0 : i32, i32, i32
  }
  func.func @transform_2(%arg0: i32) -> (i32, i32, i32) {
    %c0_i32 = arith.constant 0 : i32
    %c0_i32_0 = arith.constant 0 : i32
    %c0_i32_1 = arith.constant 0 : i32
    return %arg0, %c0_i32, %c0_i32_0 : i32, i32, i32
  }
  func.func @transform_3(%arg0: i32) -> (i32, i32) {
    %c0_i32 = arith.constant 0 : i32
    %c0_i32_0 = arith.constant 0 : i32
    %c0_i32_1 = arith.constant 0 : i32
    return %c0_i32, %c0_i32_0 : i32, i32
  }
  func.func @transform_4(%arg0: i32) -> (i32, i32, i32) {
    %c0_i32 = arith.constant 0 : i32
    %c0_i32_0 = arith.constant 0 : i32
    %c0_i32_1 = arith.constant 0 : i32
    %c0_i32_2 = arith.constant 0 : i32
    return %c0_i32, %c0_i32_0, %c0_i32_1 : i32, i32, i32
  }
  func.func @transform_5(%arg0: i32) -> (i32, i32, i32) {
    %c0_i32 = arith.constant 0 : i32
    %c0_i32_0 = arith.constant 0 : i32
    %c0_i32_1 = arith.constant 0 : i32
    %c0_i32_2 = arith.constant 0 : i32
    return %c0_i32, %c0_i32_0, %c0_i32_1 : i32, i32, i32
  }
  func.func @transform_6(%arg0: i32) -> (i32, i32, i32) {
    %c0_i32 = arith.constant 0 : i32
    %c0_i32_0 = arith.constant 0 : i32
    %c0_i32_1 = arith.constant 0 : i32
    return %arg0, %c0_i32, %c0_i32_0 : i32, i32, i32
  }
  func.func @transform_7(%arg0: i32) -> (i32, i32, i32) {
    %c0_i32 = arith.constant 0 : i32
    %c0_i32_0 = arith.constant 0 : i32
    %c0_i32_1 = arith.constant 0 : i32
    return %arg0, %c0_i32, %c0_i32_0 : i32, i32, i32
  }
  func.func @transform_8(%arg0: i32) -> (i32, i32, i32) {
    %c0_i32 = arith.constant 0 : i32
    %c0_i32_0 = arith.constant 0 : i32
    %c0_i32_1 = arith.constant 0 : i32
    return %arg0, %c0_i32, %c0_i32_0 : i32, i32, i32
  }
}

</mosaic_0001>

<llo_original>
// kernel: attention_forward.1
$region0: #{attention_forward.1}
  #allocation0 [shape = 'u32[]', space=smem, size = 0x4, offset = 0x4, fixed_abs, tag = 'smem constant byte address 0x4 - core index']
  #allocation1 [shape = 'u32[72,128]{1,0:T(1,128)}', space=vmem, size = 0x9000, scoped, tag = 'internal scratch']
  #allocation2 [shape = 'f32[7,512]{1,0:T(8,128)}', space=vmem, size = 0x4000, scoped, tag = 'scratch operand']
  %s0 = inlined_call_operand.vmem [shape: f32[2,64,256], index: 0, kind: input, shape index: {}]
  %s1 = inlined_call_operand.vmem [shape: f32[2,64,256], index: 1, kind: input, shape index: {}]
  %s2 = inlined_call_operand.vmem [shape: f32[2,64,128], index: 2, kind: input, shape index: {}]
  %s3 = inlined_call_operand.vmem [shape: f32[64,32], index: 3, kind: input, shape index: {}]
  %s4 = inlined_call_operand.vmem [shape: f32[14,7,256], index: 4, kind: input, shape index: {}]
  %s5 = inlined_call_operand.vmem [shape: f32[7,7,128], index: 5, kind: input, shape index: {}]
  %s6 = inlined_call_operand.vmem [shape: f32[2,64,256], index: 6, kind: output, shape index: {0}]
  %s7 = inlined_call_operand.vmem [shape: f32[2,64,256], index: 7, kind: output, shape index: {1}]
  %s8 = inlined_call_operand.vmem [shape: f32[2,64,128], index: 8, kind: output, shape index: {2}]
  %9 = xla_tuple %s6, %s7, %s8
  %s10 = sld [smem:[#allocation0]]
  $region73: #{attention_forward.1} parent=0
    _
  %s12 = ssub.s32 1, %s10
  %s13 = scalar_select 0, %s12, %s10
  loop: start=0, step=1, limit=4
  $region2: #{attention_forward.1} parent=0 // loop_pre_header
    _
  $region3: #{attention_forward.1} parent=0 // loop_header
    %s15 = sphi 0, %s19
    %p16 = scmp.ge.s32.totalorder %s15, 4
    %s25 = sphi 0, %s27
    %s28 = sphi 0, %s25
    %s29 = sphi 0, %s28
    %s45 = sphi 0, %s29
    %s51 = sphi 0, %s53
    %s54 = sphi 0, %s51
    %s55 = sphi 0, %s54
    %s71 = sphi 0, %s55
    %s77 = sphi 0, %s79
    %s80 = sphi 0, %s77
    %s81 = sphi 0, %s80
    %s97 = sphi 0, %s81
    %s101 = sphi 0, %s101
    %s103 = sphi 0, %s101
    %s104 = sphi 0, %s103
    %s118 = sphi 0, %s104
    %s122 = sphi 0, %s122
    %s124 = sphi 0, %s122
    %s125 = sphi 0, %s124
    %s139 = sphi 0, %s125
    %s143 = sphi 0, %s143
    %s145 = sphi 0, %s143
    %s146 = sphi 0, %s145
    %s160 = sphi 0, %s146
    %s166 = sphi 0, %s168
    %s169 = sphi 0, %s166
    %s170 = sphi 0, %s169
    %s186 = sphi 0, %s170
    %s192 = sphi 0, %s194
    %s195 = sphi 0, %s192
    %s196 = sphi 0, %s195
    %s212 = sphi 0, %s196
    %s218 = sphi 0, %s220
    %s221 = sphi 0, %s218
    %s222 = sphi 0, %s221
    %s238 = sphi 0, %s222
  $region4: #{attention_forward.1} parent=0 // loop_header_branch
    %18 = sbr.rel (%p16) target = $region8
  $region5: #{attention_forward.1} parent=0 // loop_body
    %s20 = ssub.s32 %s15, 1
    %s21 = ssub.s32 %s15, 2
    %s22 = sadd.s32 %s15, 1
    %s23 = ssub.s32 %s15, %s22
    %p24 = scmp.eq.s32.totalorder %s23, 0
    %s26 = sadd.s32 %s25, 1
    %s27 = scalar_select %p24, %s25, %s26
    %p30 = pneg %p24
    %p31 = scmp.eq.s32.totalorder %s15, 1
    %p32 = por %p30, %p31
    %p33 = scmp.ne.s32.totalorder %s25, %s28
    %p34 = scmp.eq.s32.totalorder %s15, 0
    %p35 = por %p33, %p34
    %p36 = scmp.ne.s32.totalorder %s25, %s28
    %p37 = scmp.eq.s32.totalorder %s20, 1
    %p38 = por %p36, %p37
    %p39 = scmp.ne.s32.totalorder %s28, %s29
    %p40 = scmp.eq.s32.totalorder %s20, 0
    %p41 = por %p39, %p40
    %p42 = scmp.ne.s32.totalorder %s28, %s29
    %p43 = scmp.eq.s32.totalorder %s21, 1
    %p44 = por %p42, %p43
    %p46 = scmp.ne.s32.totalorder %s29, %s45
    %p47 = scmp.eq.s32.totalorder %s21, 0
    %p48 = por %p46, %p47
    %s49 = ssub.s32 %s15, %s22
    %p50 = scmp.eq.s32.totalorder %s49, 0
    %s52 = sadd.s32 %s51, 1
    %s53 = scalar_select %p50, %s51, %s52
    %p56 = pneg %p50
    %p57 = scmp.eq.s32.totalorder %s15, 1
    %p58 = por %p56, %p57
    %p59 = scmp.ne.s32.totalorder %s51, %s54
    %p60 = scmp.eq.s32.totalorder %s15, 0
    %p61 = por %p59, %p60
    %p62 = scmp.ne.s32.totalorder %s51, %s54
    %p63 = scmp.eq.s32.totalorder %s20, 1
    %p64 = por %p62, %p63
    %p65 = scmp.ne.s32.totalorder %s54, %s55
    %p66 = scmp.eq.s32.totalorder %s20, 0
    %p67 = por %p65, %p66
    %p68 = scmp.ne.s32.totalorder %s54, %s55
    %p69 = scmp.eq.s32.totalorder %s21, 1
    %p70 = por %p68, %p69
    %p72 = scmp.ne.s32.totalorder %s55, %s71
    %p73 = scmp.eq.s32.totalorder %s21, 0
    %p74 = por %p72, %p73
    %s75 = ssub.s32 %s15, %s22
    %p76 = scmp.eq.s32.totalorder %s75, 0
    %s78 = sadd.s32 %s77, 1
    %s79 = scalar_select %p76, %s77, %s78
    %p82 = pneg %p76
    %p83 = scmp.eq.s32.totalorder %s15, 1
    %p84 = por %p82, %p83
    %p85 = scmp.ne.s32.totalorder %s77, %s80
    %p86 = scmp.eq.s32.totalorder %s15, 0
    %p87 = por %p85, %p86
    %p88 = scmp.ne.s32.totalorder %s77, %s80
    %p89 = scmp.eq.s32.totalorder %s20, 1
    %p90 = por %p88, %p89
    %p91 = scmp.ne.s32.totalorder %s80, %s81
    %p92 = scmp.eq.s32.totalorder %s20, 0
    %p93 = por %p91, %p92
    %p94 = scmp.ne.s32.totalorder %s80, %s81
    %p95 = scmp.eq.s32.totalorder %s21, 1
    %p96 = por %p94, %p95
    %p98 = scmp.ne.s32.totalorder %s81, %s97
    %p99 = scmp.eq.s32.totalorder %s21, 0
    %p100 = por %p98, %p99
    %s102 = sadd.s32 %s101, 1
    %p105 = scmp.eq.s32.totalorder %s15, 1
    %p106 = scmp.ne.s32.totalorder %s101, %s103
    %p107 = scmp.eq.s32.totalorder %s15, 0
    %p108 = por %p106, %p107
    %p109 = scmp.ne.s32.totalorder %s101, %s103
    %p110 = scmp.eq.s32.totalorder %s20, 1
    %p111 = por %p109, %p110
    %p112 = scmp.ne.s32.totalorder %s103, %s104
    %p113 = scmp.eq.s32.totalorder %s20, 0
    %p114 = por %p112, %p113
    %p115 = scmp.ne.s32.totalorder %s103, %s104
    %p116 = scmp.eq.s32.totalorder %s21, 1
    %p117 = por %p115, %p116
    %p119 = scmp.ne.s32.totalorder %s104, %s118
    %p120 = scmp.eq.s32.totalorder %s21, 0
    %p121 = por %p119, %p120
    %s123 = sadd.s32 %s122, 1
    %p126 = scmp.eq.s32.totalorder %s15, 1
    %p127 = scmp.ne.s32.totalorder %s122, %s124
    %p128 = scmp.eq.s32.totalorder %s15, 0
    %p129 = por %p127, %p128
    %p130 = scmp.ne.s32.totalorder %s122, %s124
    %p131 = scmp.eq.s32.totalorder %s20, 1
    %p132 = por %p130, %p131
    %p133 = scmp.ne.s32.totalorder %s124, %s125
    %p134 = scmp.eq.s32.totalorder %s20, 0
    %p135 = por %p133, %p134
    %p136 = scmp.ne.s32.totalorder %s124, %s125
    %p137 = scmp.eq.s32.totalorder %s21, 1
    %p138 = por %p136, %p137
    %p140 = scmp.ne.s32.totalorder %s125, %s139
    %p141 = scmp.eq.s32.totalorder %s21, 0
    %p142 = por %p140, %p141
    %s144 = sadd.s32 %s143, 1
    %p147 = scmp.eq.s32.totalorder %s15, 1
    %p148 = scmp.ne.s32.totalorder %s143, %s145
    %p149 = scmp.eq.s32.totalorder %s15, 0
    %p150 = por %p148, %p149
    %p151 = scmp.ne.s32.totalorder %s143, %s145
    %p152 = scmp.eq.s32.totalorder %s20, 1
    %p153 = por %p151, %p152
    %p154 = scmp.ne.s32.totalorder %s145, %s146
    %p155 = scmp.eq.s32.totalorder %s20, 0
    %p156 = por %p154, %p155
    %p157 = scmp.ne.s32.totalorder %s145, %s146
    %p158 = scmp.eq.s32.totalorder %s21, 1
    %p159 = por %p157, %p158
    %p161 = scmp.ne.s32.totalorder %s146, %s160
    %p162 = scmp.eq.s32.totalorder %s21, 0
    %p163 = por %p161, %p162
    %s164 = ssub.s32 %s15, %s22
    %p165 = scmp.eq.s32.totalorder %s164, 0
    %s167 = sadd.s32 %s166, 1
    %s168 = scalar_select %p165, %s166, %s167
    %p171 = pneg %p165
    %p172 = scmp.eq.s32.totalorder %s15, 1
    %p173 = por %p171, %p172
    %p174 = scmp.ne.s32.totalorder %s166, %s169
    %p175 = scmp.eq.s32.totalorder %s15, 0
    %p176 = por %p174, %p175
    %p177 = scmp.ne.s32.totalorder %s166, %s169
    %p178 = scmp.eq.s32.totalorder %s20, 1
    %p179 = por %p177, %p178
    %p180 = scmp.ne.s32.totalorder %s169, %s170
    %p181 = scmp.eq.s32.totalorder %s20, 0
    %p182 = por %p180, %p181
    %p183 = scmp.ne.s32.totalorder %s169, %s170
    %p184 = scmp.eq.s32.totalorder %s21, 1
    %p185 = por %p183, %p184
    %p187 = scmp.ne.s32.totalorder %s170, %s186
    %p188 = scmp.eq.s32.totalorder %s21, 0
    %p189 = por %p187, %p188
    %s190 = ssub.s32 %s15, %s22
    %p191 = scmp.eq.s32.totalorder %s190, 0
    %s193 = sadd.s32 %s192, 1
    %s194 = scalar_select %p191, %s192, %s193
    %p197 = pneg %p191
    %p198 = scmp.eq.s32.totalorder %s15, 1
    %p199 = por %p197, %p198
    %p200 = scmp.ne.s32.totalorder %s192, %s195
    %p201 = scmp.eq.s32.totalorder %s15, 0
    %p202 = por %p200, %p201
    %p203 = scmp.ne.s32.totalorder %s192, %s195
    %p204 = scmp.eq.s32.totalorder %s20, 1
    %p205 = por %p203, %p204
    %p206 = scmp.ne.s32.totalorder %s195, %s196
    %p207 = scmp.eq.s32.totalorder %s20, 0
    %p208 = por %p206, %p207
    %p209 = scmp.ne.s32.totalorder %s195, %s196
    %p210 = scmp.eq.s32.totalorder %s21, 1
    %p211 = por %p209, %p210
    %p213 = scmp.ne.s32.totalorder %s196, %s212
    %p214 = scmp.eq.s32.totalorder %s21, 0
    %p215 = por %p213, %p214
    %s216 = ssub.s32 %s15, %s22
    %p217 = scmp.eq.s32.totalorder %s216, 0
    %s219 = sadd.s32 %s218, 1
    %s220 = scalar_select %p217, %s218, %s219
    %p223 = pneg %p217
    %p224 = scmp.eq.s32.totalorder %s15, 1
    %p225 = por %p223, %p224
    %p226 = scmp.ne.s32.totalorder %s218, %s221
    %p227 = scmp.eq.s32.totalorder %s15, 0
    %p228 = por %p226, %p227
    %p229 = scmp.ne.s32.totalorder %s218, %s221
    %p230 = scmp.eq.s32.totalorder %s20, 1
    %p231 = por %p229, %p230
    %p232 = scmp.ne.s32.totalorder %s221, %s222
    %p233 = scmp.eq.s32.totalorder %s20, 0
    %p234 = por %p232, %p233
    %p235 = scmp.ne.s32.totalorder %s221, %s222
    %p236 = scmp.eq.s32.totalorder %s21, 1
    %p237 = por %p235, %p236
    %p239 = scmp.ne.s32.totalorder %s222, %s238
    %p240 = scmp.eq.s32.totalorder %s21, 0
    %p241 = por %p239, %p240
    %p242 = scmp.le.s32.totalorder 1, %s15
    %p243 = scmp.lt.s32.totalorder %s15, 3
    %p244 = pnand %p242, %p243
    %p245 = pneg %p244
    // Predicated region
    $region9: #{attention_forward.1} parent=5 // pred_check
      _
    $region10: #{attention_forward.1} parent=5 // pred_check_branch
      %247 = sbr.rel (%p244) target = $region12
    $region11: #{attention_forward.1} parent=5 // pred_region
      %s248 = ssub.s32 %s15, 1
      // Predicated region
      $region13: #{attention_forward.1} parent=11 // pred_check
        %p249 = pneg %p114
      $region14: #{attention_forward.1} parent=11 // pred_check_branch
        %251 = sbr.rel (%p249) target = $region16
      $region15: #{attention_forward.1} parent=11 // pred_region
        _
      $region16: #{attention_forward.1} parent=11 // pred_fallthru
        _
      // Predicated region
      $region17: #{attention_forward.1} parent=11 // pred_check
        %p252 = pneg %p135
      $region18: #{attention_forward.1} parent=11 // pred_check_branch
        %254 = sbr.rel (%p252) target = $region20
      $region19: #{attention_forward.1} parent=11 // pred_region
        _
      $region20: #{attention_forward.1} parent=11 // pred_fallthru
        _
      // Predicated region
      $region21: #{attention_forward.1} parent=11 // pred_check
        %p255 = pneg %p156
      $region22: #{attention_forward.1} parent=11 // pred_check_branch
        %257 = sbr.rel (%p255) target = $region24
      $region23: #{attention_forward.1} parent=11 // pred_region
        _
      $region24: #{attention_forward.1} parent=11 // pred_fallthru
        _
    $region12: #{attention_forward.1} parent=5 // pred_fallthru
      _
    %p258 = scmp.lt.s32.totalorder %s15, 2
    // Predicated region
    $region25: #{attention_forward.1} parent=5 // pred_check
      %p259 = pneg %p258
    $region26: #{attention_forward.1} parent=5 // pred_check_branch
      %261 = sbr.rel (%p259) target = $region28
    $region27: #{attention_forward.1} parent=5 // pred_region
      // Predicated region
      $region29: #{attention_forward.1} parent=27 // pred_check
        %p262 = pneg %p35
      $region30: #{attention_forward.1} parent=27 // pred_check_branch
        %264 = sbr.rel (%p262) target = $region32
      $region31: #{attention_forward.1} parent=27 // pred_region
        %p265 = scmp.lt.s32.totalorder %s15, 1
        %s266 = scalar_select %p265, %s15, 1
        %s267 = smul.addr %s266, 16
        %s268 = smul.addr %s267, 8
        %s269 = scalar_lea.vmem %s0, %s268
      $region32: #{attention_forward.1} parent=27 // pred_fallthru
        _
      // Predicated region
      $region33: #{attention_forward.1} parent=27 // pred_check
        %p270 = pneg %p61
      $region34: #{attention_forward.1} parent=27 // pred_check_branch
        %272 = sbr.rel (%p270) target = $region36
      $region35: #{attention_forward.1} parent=27 // pred_region
        %p273 = scmp.lt.s32.totalorder %s15, 1
        %s274 = scalar_select %p273, %s15, 1
        %s275 = smul.addr %s274, 16
        %s276 = smul.addr %s275, 8
        %s277 = scalar_lea.vmem %s1, %s276
      $region36: #{attention_forward.1} parent=27 // pred_fallthru
        _
      // Predicated region
      $region37: #{attention_forward.1} parent=27 // pred_check
        %p278 = pneg %p87
      $region38: #{attention_forward.1} parent=27 // pred_check_branch
        %280 = sbr.rel (%p278) target = $region40
      $region39: #{attention_forward.1} parent=27 // pred_region
        %p281 = scmp.lt.s32.totalorder %s15, 1
        %s282 = scalar_select %p281, %s15, 1
        %s283 = smul.addr %s282, 8
        %s284 = smul.addr %s283, 8
        %s285 = scalar_lea.vmem %s2, %s284
      $region40: #{attention_forward.1} parent=27 // pred_fallthru
        _
    $region28: #{attention_forward.1} parent=5 // pred_fallthru
      _
    %p286 = scmp.le.s32.totalorder 1, %s15
    %p287 = scmp.lt.s32.totalorder %s15, 3
    %p288 = pnand %p286, %p287
    %p289 = pneg %p288
    // Predicated region
    $region41: #{attention_forward.1} parent=5 // pred_check
      _
    $region42: #{attention_forward.1} parent=5 // pred_check_branch
      %291 = sbr.rel (%p288) target = $region44
    $region43: #{attention_forward.1} parent=5 // pred_region
      %s292 = ssub.s32 %s15, 1
      %p293 = scmp.lt.s32.totalorder %s20, 1
      %s294 = scalar_select %p293, %s20, 1
      %s295 = smul.addr %s294, 16
      %s296 = smul.addr %s295, 8
      %s297 = scalar_lea.vmem %s0, %s296
      %p298 = pneg %p41
      %p299 = pneg %p38
      %p300 = scmp.lt.s32.totalorder %s20, 1
      %s301 = scalar_select %p300, %s20, 1
      %s302 = smul.addr %s301, 16
      %s303 = smul.addr %s302, 8
      %s304 = scalar_lea.vmem %s1, %s303
      %p305 = pneg %p67
      %p306 = pneg %p64
      %p307 = scmp.lt.s32.totalorder %s20, 1
      %s308 = scalar_select %p307, %s20, 1
      %s309 = smul.addr %s308, 8
      %s310 = smul.addr %s309, 8
      %s311 = scalar_lea.vmem %s2, %s310
      %p312 = pneg %p93
      %p313 = pneg %p90
      %p314 = pneg %p114
      %p315 = pneg %p111
      %p316 = pneg %p135
      %p317 = pneg %p132
      %p318 = pneg %p156
      %p319 = pneg %p153
      %p320 = pneg %p182
      %p321 = pneg %p179
      %p322 = scmp.lt.s32.totalorder %s20, 1
      %s323 = scalar_select %p322, %s20, 1
      %s324 = smul.addr %s323, 16
      %s325 = smul.addr %s324, 8
      %s326 = scalar_lea.vmem %s6, %s325
      %p327 = pneg %p208
      %p328 = pneg %p205
      %p329 = scmp.lt.s32.totalorder %s20, 1
      %s330 = scalar_select %p329, %s20, 1
      %s331 = smul.addr %s330, 16
      %s332 = smul.addr %s331, 8
      %s333 = scalar_lea.vmem %s7, %s332
      %p334 = pneg %p234
      %p335 = pneg %p231
      %p336 = scmp.lt.s32.totalorder %s20, 1
      %s337 = scalar_select %p336, %s20, 1
      %s338 = smul.addr %s337, 8
      %s339 = smul.addr %s338, 8
      %s340 = scalar_lea.vmem %s8, %s339
      %p341 = scmp.lt.s32.totalorder %s20, 1
      %s342 = scalar_select %p341, %s20, 1
      %s343 = smul.addr %s342, 16
      %s344 = smul.addr %s343, 8
      %s345 = scalar_lea.vmem %s0, %s344
      %p346 = scmp.lt.s32.totalorder %s20, 1
      %s347 = scalar_select %p346, %s20, 1
      %s348 = smul.addr %s347, 16
      %s349 = smul.addr %s348, 8
      %s350 = scalar_lea.vmem %s1, %s349
      %p351 = scmp.lt.s32.totalorder %s20, 1
      %s352 = scalar_select %p351, %s20, 1
      %s353 = smul.addr %s352, 8
      %s354 = smul.addr %s353, 8
      %s355 = scalar_lea.vmem %s2, %s354
      %p356 = scmp.lt.s32.totalorder %s20, 1
      %s357 = scalar_select %p356, %s20, 1
      %s358 = smul.addr %s357, 16
      %s359 = smul.addr %s358, 8
      %s360 = scalar_lea.vmem %s6, %s359
      %p361 = scmp.lt.s32.totalorder %s20, 1
      %s362 = scalar_select %p361, %s20, 1
      %s363 = smul.addr %s362, 16
      %s364 = smul.addr %s363, 8
      %s365 = scalar_lea.vmem %s7, %s364
      %p366 = scmp.lt.s32.totalorder %s20, 1
      %s367 = scalar_select %p366, %s20, 1
      %s368 = smul.addr %s367, 8
      %s369 = smul.addr %s368, 8
      %s370 = scalar_lea.vmem %s8, %s369
      %371 = vst [vmem:[#allocation2] sm:$0x7f] 0.0
      %372 = vst [vmem:[#allocation2 + $0x8] sm:$0x7f] 0.0
      %373 = vst [vmem:[#allocation2 + $0x10] sm:$0x7f] 0.0
      %374 = vst [vmem:[#allocation2 + $0x18] sm:$0x7f] 0.0
      %v375 = vld [vmem:[%s345] sm:$0xff]
      %v376 = vld [vmem:[%s345 + $0x8] sm:$0xff]
      %v377 = vld [vmem:[%s345 + $0x10] sm:$0xff]
      %v378 = vld [vmem:[%s345 + $0x18] sm:$0xff]
      %v379 = vld [vmem:[%s345 + $0x20] sm:$0xff]
      %v380 = vld [vmem:[%s345 + $0x28] sm:$0xff]
      %v381 = vld [vmem:[%s345 + $0x30] sm:$0xff]
      %v382 = vld [vmem:[%s345 + $0x38] sm:$0xff]
      %v383 = vld [vmem:[%s345 + $0x40] sm:$0xff]
      %v384 = vld [vmem:[%s345 + $0x48] sm:$0xff]
      %v385 = vld [vmem:[%s345 + $0x50] sm:$0xff]
      %v386 = vld [vmem:[%s345 + $0x58] sm:$0xff]
      %v387 = vld [vmem:[%s345 + $0x60] sm:$0xff]
      %v388 = vld [vmem:[%s345 + $0x68] sm:$0xff]
      %v389 = vld [vmem:[%s345 + $0x70] sm:$0xff]
      %v390 = vld [vmem:[%s345 + $0x78] sm:$0xff]
      %v391 = vld [vmem:[%s3] sm:$0xff]
      %v392 = vld [vmem:[%s3 + $0x8] sm:$0xff]
      %v393 = vld [vmem:[%s3 + $0x10] sm:$0xff]
      %v394 = vld [vmem:[%s3 + $0x18] sm:$0xff]
      %v395 = vld [vmem:[%s3 + $0x20] sm:$0xff]
      %v396 = vld [vmem:[%s3 + $0x28] sm:$0xff]
      %v397 = vld [vmem:[%s3 + $0x30] sm:$0xff]
      %v398 = vld [vmem:[%s3 + $0x38] sm:$0xff]
      %v399 = vmax.f32 %v375, %v376
      %400 = vmax.xlane.f32.xlu0 %v399
      %v401 = vpop.xlane.xlu0 %400
      %v402 = vmax.f32 %v377, %v378
      %403 = vmax.xlane.f32.xlu0 %v402
      %v404 = vpop.xlane.xlu0 %403
      %v405 = vmax.f32 %v379, %v380
      %406 = vmax.xlane.f32.xlu0 %v405
      %v407 = vpop.xlane.xlu0 %406
      %v408 = vmax.f32 %v381, %v382
      %409 = vmax.xlane.f32.xlu0 %v408
      %v410 = vpop.xlane.xlu0 %409
      %v411 = vmax.f32 %v383, %v384
      %412 = vmax.xlane.f32.xlu0 %v411
      %v413 = vpop.xlane.xlu0 %412
      %v414 = vmax.f32 %v385, %v386
      %415 = vmax.xlane.f32.xlu0 %v414
      %v416 = vpop.xlane.xlu0 %415
      %v417 = vmax.f32 %v387, %v388
      %418 = vmax.xlane.f32.xlu0 %v417
      %v419 = vpop.xlane.xlu0 %418
      %v420 = vmax.f32 %v389, %v390
      %421 = vmax.xlane.f32.xlu0 %v420
      %v422 = vpop.xlane.xlu0 %421
      %v423 = vmul.f32 %v391, %v401
      %v424 = vmul.f32 %v392, %v404
      %v425 = vmul.f32 %v393, %v407
      %v426 = vmul.f32 %v394, %v410
      %v427 = vmul.f32 %v395, %v413
      %v428 = vmul.f32 %v396, %v416
      %v429 = vmul.f32 %v397, %v419
      %v430 = vmul.f32 %v398, %v422
      %vm431 = vcmask 31744
      %v432 = vsel %vm431, %v423, 0.0
      %v433 = vsel %vm431, %v424, 0.0
      %v434 = vadd.f32 %v432, %v433
      %v435 = vsel %vm431, %v425, 0.0
      %v436 = vadd.f32 %v434, %v435
      %v437 = vsel %vm431, %v426, 0.0
      %v438 = vadd.f32 %v436, %v437
      %v439 = vsel %vm431, %v427, 0.0
      %v440 = vadd.f32 %v438, %v439
      %v441 = vsel %vm431, %v428, 0.0
      %v442 = vadd.f32 %v440, %v441
      %v443 = vsel %vm431, %v429, 0.0
      %v444 = vadd.f32 %v442, %v443
      %v445 = vsel %vm431, %v430, 0.0
      %v446 = vadd.f32 %v444, %v445
      %v447 = vrot.slane %v446, 4
      %v448 = vadd.f32 %v446, %v447
      %v449 = vrot.slane %v448, 2
      %v450 = vadd.f32 %v448, %v449
      %v451 = vrot.slane %v450, 1
      %v452 = vadd.f32 %v450, %v451
      %v453 = vmax.f32 %v452, 0.0
      %455 = vrot.lane.b32.xlu0 %v453, 4
      %v456 = vpop.permute.xlu0 %455
      %v458 = vmul.f32 %v391, %v456
      %v459 = vmul.f32 %v392, %v456
      %v460 = vmul.f32 %v393, %v456
      %v461 = vmul.f32 %v394, %v456
      %v462 = vmul.f32 %v395, %v456
      %v463 = vmul.f32 %v396, %v456
      %v464 = vmul.f32 %v397, %v456
      %v465 = vmul.f32 %v398, %v456
      %474 = vrot.lane.b32.xlu0 %v458, 124
      %v475 = vpop.permute.xlu0 %474
      %476 = vrot.lane.b32.xlu0 %v459, 124
      %v477 = vpop.permute.xlu0 %476
      %478 = vrot.lane.b32.xlu0 %v460, 124
      %v479 = vpop.permute.xlu0 %478
      %480 = vrot.lane.b32.xlu0 %v461, 124
      %v481 = vpop.permute.xlu0 %480
      %482 = vrot.lane.b32.xlu0 %v462, 124
      %v483 = vpop.permute.xlu0 %482
      %484 = vrot.lane.b32.xlu0 %v463, 124
      %v485 = vpop.permute.xlu0 %484
      %486 = vrot.lane.b32.xlu0 %v464, 124
      %v487 = vpop.permute.xlu0 %486
      %488 = vrot.lane.b32.xlu0 %v465, 124
      %v489 = vpop.permute.xlu0 %488
      %v498 = vsel %vm431, %v475, 0.0
      %499 = vadd.xlane.f32.xlu0 %v498
      %v500 = vpop.xlane.xlu0 %499
      %v501 = vsel %vm431, %v477, 0.0
      %502 = vadd.xlane.f32.xlu0 %v501
      %v503 = vpop.xlane.xlu0 %502
      %v504 = vsel %vm431, %v479, 0.0
      %505 = vadd.xlane.f32.xlu0 %v504
      %v506 = vpop.xlane.xlu0 %505
      %v507 = vsel %vm431, %v481, 0.0
      %508 = vadd.xlane.f32.xlu0 %v507
      %v509 = vpop.xlane.xlu0 %508
      %v510 = vsel %vm431, %v483, 0.0
      %511 = vadd.xlane.f32.xlu0 %v510
      %v512 = vpop.xlane.xlu0 %511
      %v513 = vsel %vm431, %v485, 0.0
      %514 = vadd.xlane.f32.xlu0 %v513
      %v515 = vpop.xlane.xlu0 %514
      %v516 = vsel %vm431, %v487, 0.0
      %517 = vadd.xlane.f32.xlu0 %v516
      %v518 = vpop.xlane.xlu0 %517
      %v519 = vsel %vm431, %v489, 0.0
      %520 = vadd.xlane.f32.xlu0 %v519
      %v521 = vpop.xlane.xlu0 %520
      %v522 = vmul.f32 %v500, 0.5
      %v523 = vmul.f32 %v503, 0.5
      %v524 = vmul.f32 %v506, 0.5
      %v525 = vmul.f32 %v509, 0.5
      %v526 = vmul.f32 %v512, 0.5
      %v527 = vmul.f32 %v515, 0.5
      %v528 = vmul.f32 %v518, 0.5
      %v529 = vmul.f32 %v521, 0.5
      %v530 = vtanh.pop %v522
      %v531 = vtanh.pop %v523
      %v532 = vtanh.pop %v524
      %v533 = vtanh.pop %v525
      %v534 = vtanh.pop %v526
      %v535 = vtanh.pop %v527
      %v536 = vtanh.pop %v528
      %v537 = vtanh.pop %v529
      %v538 = vadd.f32 %v530, 1.0
      %v539 = vadd.f32 %v531, 1.0
      %v540 = vadd.f32 %v532, 1.0
      %v541 = vadd.f32 %v533, 1.0
      %v542 = vadd.f32 %v534, 1.0
      %v543 = vadd.f32 %v535, 1.0
      %v544 = vadd.f32 %v536, 1.0
      %v545 = vadd.f32 %v537, 1.0
      %v546 = vmul.f32 %v538, 0.5
      %v547 = vmul.f32 %v539, 0.5
      %v548 = vmul.f32 %v540, 0.5
      %v549 = vmul.f32 %v541, 0.5
      %v550 = vmul.f32 %v542, 0.5
      %v551 = vmul.f32 %v543, 0.5
      %v552 = vmul.f32 %v544, 0.5
      %v553 = vmul.f32 %v545, 0.5
      %v554 = vmul.f32 %v375, %v546
      %v555 = vmul.f32 %v376, %v546
      %v556 = vmul.f32 %v377, %v547
      %v557 = vmul.f32 %v378, %v547
      %v558 = vmul.f32 %v379, %v548
      %v559 = vmul.f32 %v380, %v548
      %v560 = vmul.f32 %v381, %v549
      %v561 = vmul.f32 %v382, %v549
      %v562 = vmul.f32 %v383, %v550
      %v563 = vmul.f32 %v384, %v550
      %v564 = vmul.f32 %v385, %v551
      %v565 = vmul.f32 %v386, %v551
      %v566 = vmul.f32 %v387, %v552
      %v567 = vmul.f32 %v388, %v552
      %v568 = vmul.f32 %v389, %v553
      %v569 = vmul.f32 %v390, %v553
      %v570 = vmax.f32 %v554, %v558
      %v571 = vmax.f32 %v556, %v560
      %v572 = vmax.f32 %v570, %v562
      %v573 = vmax.f32 %v571, %v564
      %v574 = vmax.f32 %v572, %v566
      %v575 = vmax.f32 %v573, %v568
      %v576 = vmax.f32 %v574, %v575
      %v577 = vrot.slane %v576, 4
      %v578 = vmax.f32 %v576, %v577
      %v579 = vrot.slane %v578, 2
      %v580 = vmax.f32 %v578, %v579
      %v581 = vrot.slane %v580, 1
      %v582 = vmax.f32 %v580, %v581
      %v583 = vmax.f32 %v555, %v559
      %v584 = vmax.f32 %v557, %v561
      %v585 = vmax.f32 %v583, %v563
      %v586 = vmax.f32 %v584, %v565
      %v587 = vmax.f32 %v585, %v567
      %v588 = vmax.f32 %v586, %v569
      %v589 = vmax.f32 %v587, %v588
      %v590 = vrot.slane %v589, 4
      %v591 = vmax.f32 %v589, %v590
      %v592 = vrot.slane %v591, 2
      %v593 = vmax.f32 %v591, %v592
      %v594 = vrot.slane %v593, 1
      %v595 = vmax.f32 %v593, %v594
      %v598 = vrot.slane %v595, 7
      %vm599 = vcmask 1040384
      %v600 = vsel %vm599, %v582, %v598
      %v602 = vlaneseq
      %vm603 = vcmp.ge.s32.totalorder %v602, 0
      %vm604 = vcmp.lt.s32.totalorder %v602, 256
      %vm605 = vmand %vm603, %vm604
      %s606 = scalar_lea.vmem [#allocation2], 11
      %607 = vst.msk [vmem:[%s606] ss:$8 sm:$0x3] %vm605, %v600
      %608 = vst.msk [vmem:[%s606] ss:$8 sm:$0x0] %vm605, %v600
      %s609 = scalar_lea.vmem [#allocation2], 3
      %v610 = vld [vmem:[%s609] ss:$8 sm:$0x7]
      %612 = vrot.lane.b32.xlu0 %v610, 3
      %v613 = vpop.permute.xlu0 %612
      %v614 = vrot.slane %v613, 1
      %vm615 = vcmask 23552
      %v616 = vsel %vm615, %v613, %v614
      %s618 = scalar_lea.vmem [#allocation2], 8
      %619 = vst.msk [vmem:[%s618] ss:$8 sm:$0x3] %vm605, %v616
      %620 = vst.msk [vmem:[%s618] ss:$8 sm:$0x0] %vm605, %v616
      %v621 = vld [vmem:[%s609] ss:$8 sm:$0x7]
      %623 = vrot.lane.b32.xlu0 %v621, 2
      %v624 = vpop.permute.xlu0 %623
      %v625 = vrot.slane %v624, 1
      %vm626 = vcmask 15360
      %v627 = vsel %vm626, %v624, %v625
      %s629 = scalar_lea.vmem [#allocation2], 9
      %630 = vst.msk [vmem:[%s629] ss:$8 sm:$0x3] %vm605, %v627
      %631 = vst.msk [vmem:[%s629] ss:$8 sm:$0x0] %vm605, %v627
      %v632 = vld [vmem:[%s609] ss:$8 sm:$0x7]
      %634 = vrot.lane.b32.xlu0 %v632, 1
      %v635 = vpop.permute.xlu0 %634
      %v636 = vrot.slane %v635, 1
      %vm637 = vcmask 7168
      %v638 = vsel %vm637, %v635, %v636
      %s640 = scalar_lea.vmem [#allocation2], 10
      %641 = vst.msk [vmem:[%s640] ss:$8 sm:$0x3] %vm605, %v638
      %642 = vst.msk [vmem:[%s640] ss:$8 sm:$0x0] %vm605, %v638
      %v643 = vld [vmem:[%s606] ss:$8 sm:$0x7]
      %645 = vrot.lane.b32.xlu0 %v643, 127
      %v646 = vpop.permute.xlu0 %645
      %v647 = vrot.slane %v646, 1
      %vm648 = vcmask 1039360
      %v649 = vsel %vm648, %v646, %v647
      %s651 = scalar_lea.vmem [#allocation2], 12
      %652 = vst.msk [vmem:[%s651] ss:$8 sm:$0x3] %vm605, %v649
      %653 = vst.msk [vmem:[%s651] ss:$8 sm:$0x0] %vm605, %v649
      %v654 = vld [vmem:[%s606] ss:$8 sm:$0x7]
      %656 = vrot.lane.b32.xlu0 %v654, 126
      %v657 = vpop.permute.xlu0 %656
      %v658 = vrot.slane %v657, 1
      %vm659 = vcmask 1031168
      %v660 = vsel %vm659, %v657, %v658
      %s662 = scalar_lea.vmem [#allocation2], 13
      %663 = vst.msk [vmem:[%s662] ss:$8 sm:$0x3] %vm605, %v660
      %664 = vst.msk [vmem:[%s662] ss:$8 sm:$0x0] %vm605, %v660
      %v665 = vld [vmem:[%s606] ss:$8 sm:$0x7]
      %667 = vrot.lane.b32.xlu0 %v665, 125
      %v668 = vpop.permute.xlu0 %667
      %v669 = vrot.slane %v668, 1
      %vm670 = vcmask 1022976
      %v671 = vsel %vm670, %v668, %v669
      %s673 = scalar_lea.vmem [#allocation2], 14
      %674 = vst.msk [vmem:[%s673] ss:$8 sm:$0x3] %vm605, %v671
      %675 = vst.msk [vmem:[%s673] ss:$8 sm:$0x0] %vm605, %v671
      %v676 = vld [vmem:[#allocation2] sm:$0x7f]
      %v677 = vld [vmem:[#allocation2 + $0x8] sm:$0x7f]
      %v678 = vld [vmem:[#allocation2 + $0x10] sm:$0x7f]
      %v679 = vld [vmem:[%s4] sm:$0x7f]
      %v680 = vld [vmem:[%s4 + $0x8] sm:$0x7f]
      %684 = vrot.lane.b32.xlu0 %v676, 48
      %v685 = vpop.permute.xlu0 %684
      %686 = vrot.lane.b32.xlu0 %v677, 48
      %v687 = vpop.permute.xlu0 %686
      %688 = vrot.lane.b32.xlu0 %v678, 48
      %v689 = vpop.permute.xlu0 %688
      %vm690 = vcmask 392192
      %v691 = vsel %vm690, %v685, %v687
      %v692 = vsel %vm690, %v687, %v689
      %v695 = vmul.f32 %v679, %v691
      %v696 = vmul.f32 %v680, %v692
      %s697 = scalar_lea.vmem %s4, 16
      %v698 = vld [vmem:[%s697] sm:$0x7f]
      %v699 = vld [vmem:[%s697 + $0x8] sm:$0x7f]
      %700 = vrot.lane.b32.xlu0 %v676, 32
      %v701 = vpop.permute.xlu0 %700
      %702 = vrot.lane.b32.xlu0 %v677, 32
      %v703 = vpop.permute.xlu0 %702
      %704 = vrot.lane.b32.xlu0 %v678, 32
      %v705 = vpop.permute.xlu0 %704
      %vm706 = vcmask 261120
      %v707 = vsel %vm706, %v701, %v703
      %v708 = vsel %vm706, %v703, %v705
      %v711 = vmul.f32 %v698, %v707
      %v712 = vmul.f32 %v699, %v708
      %s713 = scalar_lea.vmem %s4, 32
      %v714 = vld [vmem:[%s713] sm:$0x7f]
      %v715 = vld [vmem:[%s713 + $0x8] sm:$0x7f]
      %716 = vrot.lane.b32.xlu0 %v676, 16
      %v717 = vpop.permute.xlu0 %716
      %718 = vrot.lane.b32.xlu0 %v677, 16
      %v719 = vpop.permute.xlu0 %718
      %720 = vrot.lane.b32.xlu0 %v678, 16
      %v721 = vpop.permute.xlu0 %720
      %vm722 = vcmask 130048
      %v723 = vsel %vm722, %v717, %v719
      %v724 = vsel %vm722, %v719, %v721
      %v727 = vmul.f32 %v714, %v723
      %v728 = vmul.f32 %v715, %v724
      %s729 = scalar_lea.vmem %s4, 48
      %v730 = vld [vmem:[%s729] sm:$0x7f]
      %v731 = vld [vmem:[%s729 + $0x8] sm:$0x7f]
      %v732 = vmul.f32 %v730, %v677
      %v733 = vmul.f32 %v731, %v678
      %v734 = vadd.f32 %v695, %v732
      %v735 = vadd.f32 %v696, %v733
      %v736 = vld [vmem:[#allocation2 + $0x18] sm:$0x7f]
      %s737 = scalar_lea.vmem %s4, 64
      %v738 = vld [vmem:[%s737] sm:$0x7f]
      %v739 = vld [vmem:[%s737 + $0x8] sm:$0x7f]
      %741 = vrot.lane.b32.xlu0 %v677, 112
      %v742 = vpop.permute.xlu0 %741
      %743 = vrot.lane.b32.xlu0 %v678, 112
      %v744 = vpop.permute.xlu0 %743
      %745 = vrot.lane.b32.xlu0 %v736, 112
      %v746 = vpop.permute.xlu0 %745
      %vm747 = vcmask 916480
      %v748 = vsel %vm747, %v742, %v744
      %v749 = vsel %vm747, %v744, %v746
      %v752 = vmul.f32 %v738, %v748
      %v753 = vmul.f32 %v739, %v749
      %v754 = vadd.f32 %v711, %v752
      %v755 = vadd.f32 %v712, %v753
      %s756 = scalar_lea.vmem %s4, 80
      %v757 = vld [vmem:[%s756] sm:$0x7f]
      %v758 = vld [vmem:[%s756 + $0x8] sm:$0x7f]
      %759 = vrot.lane.b32.xlu0 %v677, 96
      %v760 = vpop.permute.xlu0 %759
      %761 = vrot.lane.b32.xlu0 %v678, 96
      %v762 = vpop.permute.xlu0 %761
      %763 = vrot.lane.b32.xlu0 %v736, 96
      %v764 = vpop.permute.xlu0 %763
      %vm765 = vcmask 785408
      %v766 = vsel %vm765, %v760, %v762
      %v767 = vsel %vm765, %v762, %v764
      %v770 = vmul.f32 %v757, %v766
      %v771 = vmul.f32 %v758, %v767
      %v772 = vadd.f32 %v727, %v770
      %v773 = vadd.f32 %v728, %v771
      %s774 = scalar_lea.vmem %s4, 96
      %v775 = vld [vmem:[%s774] sm:$0x7f]
      %v776 = vld [vmem:[%s774 + $0x8] sm:$0x7f]
      %777 = vrot.lane.b32.xlu0 %v677, 80
      %v778 = vpop.permute.xlu0 %777
      %779 = vrot.lane.b32.xlu0 %v678, 80
      %v780 = vpop.permute.xlu0 %779
      %781 = vrot.lane.b32.xlu0 %v736, 80
      %v782 = vpop.permute.xlu0 %781
      %vm783 = vcmask 654336
      %v784 = vsel %vm783, %v778, %v780
      %v785 = vsel %vm783, %v780, %v782
      %v788 = vmul.f32 %v775, %v784
      %v789 = vmul.f32 %v776, %v785
      %v790 = vadd.f32 %v734, %v788
      %v791 = vadd.f32 %v735, %v789
      %v792 = vadd.f32 %v790, %v754
      %v793 = vadd.f32 %v791, %v755
      %v794 = vadd.f32 %v792, %v772
      %v795 = vadd.f32 %v793, %v773
      %vm796 = vcmask 1046528
      %v797 = vsel %vm796, %v794, 0.0
      %v798 = vrot.slane %v797, 4
      %v799 = vadd.f32 %v797, %v798
      %v800 = vrot.slane %v799, 2
      %v801 = vadd.f32 %v799, %v800
      %v802 = vrot.slane %v801, 1
      %v803 = vadd.f32 %v801, %v802
      %v804 = vsel %vm796, %v795, 0.0
      %v805 = vrot.slane %v804, 4
      %v806 = vadd.f32 %v804, %v805
      %v807 = vrot.slane %v806, 2
      %v808 = vadd.f32 %v806, %v807
      %v809 = vrot.slane %v808, 1
      %v810 = vadd.f32 %v808, %v809
      %v811 = vmul.f32 %v803, 0.5
      %v812 = vmul.f32 %v810, 0.5
      %v813 = vtanh.pop %v811
      %v814 = vtanh.pop %v812
      %v815 = vadd.f32 %v813, 1.0
      %v816 = vadd.f32 %v814, 1.0
      %v817 = vmul.f32 %v815, 0.5
      %v818 = vmul.f32 %v816, 0.5
      %v819 = vmul.f32 %v554, %v817
      %v820 = vmul.f32 %v555, %v818
      %v821 = vmul.f32 %v556, %v817
      %v822 = vmul.f32 %v557, %v818
      %v823 = vmul.f32 %v558, %v817
      %v824 = vmul.f32 %v559, %v818
      %v825 = vmul.f32 %v560, %v817
      %v826 = vmul.f32 %v561, %v818
      %v827 = vmul.f32 %v562, %v817
      %v828 = vmul.f32 %v563, %v818
      %v829 = vmul.f32 %v564, %v817
      %v830 = vmul.f32 %v565, %v818
      %v831 = vmul.f32 %v566, %v817
      %v832 = vmul.f32 %v567, %v818
      %v833 = vmul.f32 %v568, %v817
      %v834 = vmul.f32 %v569, %v818
      %835 = vst [vmem:[%s360] sm:$0xff] %v819
      %836 = vst [vmem:[%s360 + $0x8] sm:$0xff] %v820
      %837 = vst [vmem:[%s360 + $0x10] sm:$0xff] %v821
      %838 = vst [vmem:[%s360 + $0x18] sm:$0xff] %v822
      %839 = vst [vmem:[%s360 + $0x20] sm:$0xff] %v823
      %840 = vst [vmem:[%s360 + $0x28] sm:$0xff] %v824
      %841 = vst [vmem:[%s360 + $0x30] sm:$0xff] %v825
      %842 = vst [vmem:[%s360 + $0x38] sm:$0xff] %v826
      %843 = vst [vmem:[%s360 + $0x40] sm:$0xff] %v827
      %844 = vst [vmem:[%s360 + $0x48] sm:$0xff] %v828
      %845 = vst [vmem:[%s360 + $0x50] sm:$0xff] %v829
      %846 = vst [vmem:[%s360 + $0x58] sm:$0xff] %v830
      %847 = vst [vmem:[%s360 + $0x60] sm:$0xff] %v831
      %848 = vst [vmem:[%s360 + $0x68] sm:$0xff] %v832
      %849 = vst [vmem:[%s360 + $0x70] sm:$0xff] %v833
      %850 = vst [vmem:[%s360 + $0x78] sm:$0xff] %v834
      %v851 = vld [vmem:[%s350] sm:$0xff]
      %v852 = vld [vmem:[%s350 + $0x8] sm:$0xff]
      %v853 = vld [vmem:[%s350 + $0x10] sm:$0xff]
      %v854 = vld [vmem:[%s350 + $0x18] sm:$0xff]
      %v855 = vld [vmem:[%s350 + $0x20] sm:$0xff]
      %v856 = vld [vmem:[%s350 + $0x28] sm:$0xff]
      %v857 = vld [vmem:[%s350 + $0x30] sm:$0xff]
      %v858 = vld [vmem:[%s350 + $0x38] sm:$0xff]
      %v859 = vld [vmem:[%s350 + $0x40] sm:$0xff]
      %v860 = vld [vmem:[%s350 + $0x48] sm:$0xff]
      %v861 = vld [vmem:[%s350 + $0x50] sm:$0xff]
      %v862 = vld [vmem:[%s350 + $0x58] sm:$0xff]
      %v863 = vld [vmem:[%s350 + $0x60] sm:$0xff]
      %v864 = vld [vmem:[%s350 + $0x68] sm:$0xff]
      %v865 = vld [vmem:[%s350 + $0x70] sm:$0xff]
      %v866 = vld [vmem:[%s350 + $0x78] sm:$0xff]
      %v867 = vld [vmem:[%s3] sm:$0xff]
      %v868 = vld [vmem:[%s3 + $0x8] sm:$0xff]
      %v869 = vld [vmem:[%s3 + $0x10] sm:$0xff]
      %v870 = vld [vmem:[%s3 + $0x18] sm:$0xff]
      %v871 = vld [vmem:[%s3 + $0x20] sm:$0xff]
      %v872 = vld [vmem:[%s3 + $0x28] sm:$0xff]
      %v873 = vld [vmem:[%s3 + $0x30] sm:$0xff]
      %v874 = vld [vmem:[%s3 + $0x38] sm:$0xff]
      %v875 = vmax.f32 %v851, %v852
      %876 = vmax.xlane.f32.xlu0 %v875
      %v877 = vpop.xlane.xlu0 %876
      %v878 = vmax.f32 %v853, %v854
      %879 = vmax.xlane.f32.xlu0 %v878
      %v880 = vpop.xlane.xlu0 %879
      %v881 = vmax.f32 %v855, %v856
      %882 = vmax.xlane.f32.xlu0 %v881
      %v883 = vpop.xlane.xlu0 %882
      %v884 = vmax.f32 %v857, %v858
      %885 = vmax.xlane.f32.xlu0 %v884
      %v886 = vpop.xlane.xlu0 %885
      %v887 = vmax.f32 %v859, %v860
      %888 = vmax.xlane.f32.xlu0 %v887
      %v889 = vpop.xlane.xlu0 %888
      %v890 = vmax.f32 %v861, %v862
      %891 = vmax.xlane.f32.xlu0 %v890
      %v892 = vpop.xlane.xlu0 %891
      %v893 = vmax.f32 %v863, %v864
      %894 = vmax.xlane.f32.xlu0 %v893
      %v895 = vpop.xlane.xlu0 %894
      %v896 = vmax.f32 %v865, %v866
      %897 = vmax.xlane.f32.xlu0 %v896
      %v898 = vpop.xlane.xlu0 %897
      %v899 = vmul.f32 %v867, %v877
      %v900 = vmul.f32 %v868, %v880
      %v901 = vmul.f32 %v869, %v883
      %v902 = vmul.f32 %v870, %v886
      %v903 = vmul.f32 %v871, %v889
      %v904 = vmul.f32 %v872, %v892
      %v905 = vmul.f32 %v873, %v895
      %v906 = vmul.f32 %v874, %v898
      %vm907 = vcmask 97344
      %v908 = vsel %vm907, %v899, 0.0
      %v909 = vsel %vm907, %v900, 0.0
      %v910 = vadd.f32 %v908, %v909
      %v911 = vsel %vm907, %v901, 0.0
      %v912 = vadd.f32 %v910, %v911
      %v913 = vsel %vm907, %v902, 0.0
      %v914 = vadd.f32 %v912, %v913
      %v915 = vsel %vm907, %v903, 0.0
      %v916 = vadd.f32 %v914, %v915
      %v917 = vsel %vm907, %v904, 0.0
      %v918 = vadd.f32 %v916, %v917
      %v919 = vsel %vm907, %v905, 0.0
      %v920 = vadd.f32 %v918, %v919
      %v921 = vsel %vm907, %v906, 0.0
      %v922 = vadd.f32 %v920, %v921
      %v923 = vrot.slane %v922, 4
      %v924 = vadd.f32 %v922, %v923
      %v925 = vrot.slane %v924, 2
      %v926 = vadd.f32 %v924, %v925
      %v927 = vrot.slane %v926, 1
      %v928 = vadd.f32 %v926, %v927
      %v929 = vmax.f32 %v928, 0.0
      %931 = vrot.lane.b32.xlu0 %v929, 4
      %v932 = vpop.permute.xlu0 %931
      %v934 = vmul.f32 %v867, %v932
      %v935 = vmul.f32 %v868, %v932
      %v936 = vmul.f32 %v869, %v932
      %v937 = vmul.f32 %v870, %v932
      %v938 = vmul.f32 %v871, %v932
      %v939 = vmul.f32 %v872, %v932
      %v940 = vmul.f32 %v873, %v932
      %v941 = vmul.f32 %v874, %v932
      %950 = vrot.lane.b32.xlu0 %v934, 116
      %v951 = vpop.permute.xlu0 %950
      %952 = vrot.lane.b32.xlu0 %v935, 116
      %v953 = vpop.permute.xlu0 %952
      %954 = vrot.lane.b32.xlu0 %v936, 116
      %v955 = vpop.permute.xlu0 %954
      %956 = vrot.lane.b32.xlu0 %v937, 116
      %v957 = vpop.permute.xlu0 %956
      %958 = vrot.lane.b32.xlu0 %v938, 116
      %v959 = vpop.permute.xlu0 %958
      %960 = vrot.lane.b32.xlu0 %v939, 116
      %v961 = vpop.permute.xlu0 %960
      %962 = vrot.lane.b32.xlu0 %v940, 116
      %v963 = vpop.permute.xlu0 %962
      %964 = vrot.lane.b32.xlu0 %v941, 116
      %v965 = vpop.permute.xlu0 %964
      %v974 = vsel %vm431, %v951, 0.0
      %975 = vadd.xlane.f32.xlu0 %v974
      %v976 = vpop.xlane.xlu0 %975
      %v977 = vsel %vm431, %v953, 0.0
      %978 = vadd.xlane.f32.xlu0 %v977
      %v979 = vpop.xlane.xlu0 %978
      %v980 = vsel %vm431, %v955, 0.0
      %981 = vadd.xlane.f32.xlu0 %v980
      %v982 = vpop.xlane.xlu0 %981
      %v983 = vsel %vm431, %v957, 0.0
      %984 = vadd.xlane.f32.xlu0 %v983
      %v985 = vpop.xlane.xlu0 %984
      %v986 = vsel %vm431, %v959, 0.0
      %987 = vadd.xlane.f32.xlu0 %v986
      %v988 = vpop.xlane.xlu0 %987
      %v989 = vsel %vm431, %v961, 0.0
      %990 = vadd.xlane.f32.xlu0 %v989
      %v991 = vpop.xlane.xlu0 %990
      %v992 = vsel %vm431, %v963, 0.0
      %993 = vadd.xlane.f32.xlu0 %v992
      %v994 = vpop.xlane.xlu0 %993
      %v995 = vsel %vm431, %v965, 0.0
      %996 = vadd.xlane.f32.xlu0 %v995
      %v997 = vpop.xlane.xlu0 %996
      %v998 = vmul.f32 %v976, 0.5
      %v999 = vmul.f32 %v979, 0.5
      %v1000 = vmul.f32 %v982, 0.5
      %v1001 = vmul.f32 %v985, 0.5
      %v1002 = vmul.f32 %v988, 0.5
      %v1003 = vmul.f32 %v991, 0.5
      %v1004 = vmul.f32 %v994, 0.5
      %v1005 = vmul.f32 %v997, 0.5
      %v1006 = vtanh.pop %v998
      %v1007 = vtanh.pop %v999
      %v1008 = vtanh.pop %v1000
      %v1009 = vtanh.pop %v1001
      %v1010 = vtanh.pop %v1002
      %v1011 = vtanh.pop %v1003
      %v1012 = vtanh.pop %v1004
      %v1013 = vtanh.pop %v1005
      %v1014 = vadd.f32 %v1006, 1.0
      %v1015 = vadd.f32 %v1007, 1.0
      %v1016 = vadd.f32 %v1008, 1.0
      %v1017 = vadd.f32 %v1009, 1.0
      %v1018 = vadd.f32 %v1010, 1.0
      %v1019 = vadd.f32 %v1011, 1.0
      %v1020 = vadd.f32 %v1012, 1.0
      %v1021 = vadd.f32 %v1013, 1.0
      %v1022 = vmul.f32 %v1014, 0.5
      %v1023 = vmul.f32 %v1015, 0.5
      %v1024 = vmul.f32 %v1016, 0.5
      %v1025 = vmul.f32 %v1017, 0.5
      %v1026 = vmul.f32 %v1018, 0.5
      %v1027 = vmul.f32 %v1019, 0.5
      %v1028 = vmul.f32 %v1020, 0.5
      %v1029 = vmul.f32 %v1021, 0.5
      %v1030 = vmul.f32 %v851, %v1022
      %v1031 = vmul.f32 %v852, %v1022
      %v1032 = vmul.f32 %v853, %v1023
      %v1033 = vmul.f32 %v854, %v1023
      %v1034 = vmul.f32 %v855, %v1024
      %v1035 = vmul.f32 %v856, %v1024
      %v1036 = vmul.f32 %v857, %v1025
      %v1037 = vmul.f32 %v858, %v1025
      %v1038 = vmul.f32 %v859, %v1026
      %v1039 = vmul.f32 %v860, %v1026
      %v1040 = vmul.f32 %v861, %v1027
      %v1041 = vmul.f32 %v862, %v1027
      %v1042 = vmul.f32 %v863, %v1028
      %v1043 = vmul.f32 %v864, %v1028
      %v1044 = vmul.f32 %v865, %v1029
      %v1045 = vmul.f32 %v866, %v1029
      %v1046 = vmax.f32 %v1030, %v1034
      %v1047 = vmax.f32 %v1032, %v1036
      %v1048 = vmax.f32 %v1046, %v1038
      %v1049 = vmax.f32 %v1047, %v1040
      %v1050 = vmax.f32 %v1048, %v1042
      %v1051 = vmax.f32 %v1049, %v1044
      %v1052 = vmax.f32 %v1050, %v1051
      %v1053 = vrot.slane %v1052, 4
      %v1054 = vmax.f32 %v1052, %v1053
      %v1055 = vrot.slane %v1054, 2
      %v1056 = vmax.f32 %v1054, %v1055
      %v1057 = vrot.slane %v1056, 1
      %v1058 = vmax.f32 %v1056, %v1057
      %v1059 = vmax.f32 %v1031, %v1035
      %v1060 = vmax.f32 %v1033, %v1037
      %v1061 = vmax.f32 %v1059, %v1039
      %v1062 = vmax.f32 %v1060, %v1041
      %v1063 = vmax.f32 %v1061, %v1043
      %v1064 = vmax.f32 %v1062, %v1045
      %v1065 = vmax.f32 %v1063, %v1064
      %v1066 = vrot.slane %v1065, 4
      %v1067 = vmax.f32 %v1065, %v1066
      %v1068 = vrot.slane %v1067, 2
      %v1069 = vmax.f32 %v1067, %v1068
      %v1070 = vrot.slane %v1069, 1
      %v1071 = vmax.f32 %v1069, %v1070
      %v1074 = vrot.slane %v1071, 7
      %v1075 = vsel %vm599, %v1058, %v1074
      %1077 = vst.msk [vmem:[%s606] ss:$8 sm:$0x3] %vm605, %v1075
      %1078 = vst.msk [vmem:[%s606] ss:$8 sm:$0x0] %vm605, %v1075
      %v1079 = vld [vmem:[%s609] ss:$8 sm:$0x7]
      %1081 = vrot.lane.b32.xlu0 %v1079, 3
      %v1082 = vpop.permute.xlu0 %1081
      %v1083 = vrot.slane %v1082, 1
      %v1084 = vsel %vm615, %v1082, %v1083
      %1086 = vst.msk [vmem:[%s618] ss:$8 sm:$0x3] %vm605, %v1084
      %1087 = vst.msk [vmem:[%s618] ss:$8 sm:$0x0] %vm605, %v1084
      %v1088 = vld [vmem:[%s609] ss:$8 sm:$0x7]
      %1090 = vrot.lane.b32.xlu0 %v1088, 2
      %v1091 = vpop.permute.xlu0 %1090
      %v1092 = vrot.slane %v1091, 1
      %v1093 = vsel %vm626, %v1091, %v1092
      %1095 = vst.msk [vmem:[%s629] ss:$8 sm:$0x3] %vm605, %v1093
      %1096 = vst.msk [vmem:[%s629] ss:$8 sm:$0x0] %vm605, %v1093
      %v1097 = vld [vmem:[%s609] ss:$8 sm:$0x7]
      %1099 = vrot.lane.b32.xlu0 %v1097, 1
      %v1100 = vpop.permute.xlu0 %1099
      %v1101 = vrot.slane %v1100, 1
      %v1102 = vsel %vm637, %v1100, %v1101
      %1104 = vst.msk [vmem:[%s640] ss:$8 sm:$0x3] %vm605, %v1102
      %1105 = vst.msk [vmem:[%s640] ss:$8 sm:$0x0] %vm605, %v1102
      %v1106 = vld [vmem:[%s606] ss:$8 sm:$0x7]
      %1108 = vrot.lane.b32.xlu0 %v1106, 127
      %v1109 = vpop.permute.xlu0 %1108
      %v1110 = vrot.slane %v1109, 1
      %v1111 = vsel %vm648, %v1109, %v1110
      %1113 = vst.msk [vmem:[%s651] ss:$8 sm:$0x3] %vm605, %v1111
      %1114 = vst.msk [vmem:[%s651] ss:$8 sm:$0x0] %vm605, %v1111
      %v1115 = vld [vmem:[%s606] ss:$8 sm:$0x7]
      %1117 = vrot.lane.b32.xlu0 %v1115, 126
      %v1118 = vpop.permute.xlu0 %1117
      %v1119 = vrot.slane %v1118, 1
      %v1120 = vsel %vm659, %v1118, %v1119
      %1122 = vst.msk [vmem:[%s662] ss:$8 sm:$0x3] %vm605, %v1120
      %1123 = vst.msk [vmem:[%s662] ss:$8 sm:$0x0] %vm605, %v1120
      %v1124 = vld [vmem:[%s606] ss:$8 sm:$0x7]
      %1126 = vrot.lane.b32.xlu0 %v1124, 125
      %v1127 = vpop.permute.xlu0 %1126
      %v1128 = vrot.slane %v1127, 1
      %v1129 = vsel %vm670, %v1127, %v1128
      %1131 = vst.msk [vmem:[%s673] ss:$8 sm:$0x3] %vm605, %v1129
      %1132 = vst.msk [vmem:[%s673] ss:$8 sm:$0x0] %vm605, %v1129
      %v1133 = vld [vmem:[#allocation2] sm:$0x7f]
      %v1134 = vld [vmem:[#allocation2 + $0x8] sm:$0x7f]
      %v1135 = vld [vmem:[#allocation2 + $0x10] sm:$0x7f]
      %s1136 = scalar_lea.vmem %s4, 112
      %v1137 = vld [vmem:[%s1136] sm:$0x7f]
      %v1138 = vld [vmem:[%s1136 + $0x8] sm:$0x7f]
      %1142 = vrot.lane.b32.xlu0 %v1133, 48
      %v1143 = vpop.permute.xlu0 %1142
      %1144 = vrot.lane.b32.xlu0 %v1134, 48
      %v1145 = vpop.permute.xlu0 %1144
      %1146 = vrot.lane.b32.xlu0 %v1135, 48
      %v1147 = vpop.permute.xlu0 %1146
      %v1148 = vsel %vm690, %v1143, %v1145
      %v1149 = vsel %vm690, %v1145, %v1147
      %v1152 = vmul.f32 %v1137, %v1148
      %v1153 = vmul.f32 %v1138, %v1149
      %s1154 = scalar_lea.vmem %s4, 128
      %v1155 = vld [vmem:[%s1154] sm:$0x7f]
      %v1156 = vld [vmem:[%s1154 + $0x8] sm:$0x7f]
      %1157 = vrot.lane.b32.xlu0 %v1133, 32
      %v1158 = vpop.permute.xlu0 %1157
      %1159 = vrot.lane.b32.xlu0 %v1134, 32
      %v1160 = vpop.permute.xlu0 %1159
      %1161 = vrot.lane.b32.xlu0 %v1135, 32
      %v1162 = vpop.permute.xlu0 %1161
      %v1163 = vsel %vm706, %v1158, %v1160
      %v1164 = vsel %vm706, %v1160, %v1162
      %v1167 = vmul.f32 %v1155, %v1163
      %v1168 = vmul.f32 %v1156, %v1164
      %s1169 = scalar_lea.vmem %s4, 144
      %v1170 = vld [vmem:[%s1169] sm:$0x7f]
      %v1171 = vld [vmem:[%s1169 + $0x8] sm:$0x7f]
      %1172 = vrot.lane.b32.xlu0 %v1133, 16
      %v1173 = vpop.permute.xlu0 %1172
      %1174 = vrot.lane.b32.xlu0 %v1134, 16
      %v1175 = vpop.permute.xlu0 %1174
      %1176 = vrot.lane.b32.xlu0 %v1135, 16
      %v1177 = vpop.permute.xlu0 %1176
      %v1178 = vsel %vm722, %v1173, %v1175
      %v1179 = vsel %vm722, %v1175, %v1177
      %v1182 = vmul.f32 %v1170, %v1178
      %v1183 = vmul.f32 %v1171, %v1179
      %s1184 = scalar_lea.vmem %s4, 160
      %v1185 = vld [vmem:[%s1184] sm:$0x7f]
      %v1186 = vld [vmem:[%s1184 + $0x8] sm:$0x7f]
      %v1187 = vmul.f32 %v1185, %v1134
      %v1188 = vmul.f32 %v1186, %v1135
      %v1189 = vadd.f32 %v1152, %v1187
      %v1190 = vadd.f32 %v1153, %v1188
      %v1191 = vld [vmem:[#allocation2 + $0x18] sm:$0x7f]
      %s1192 = scalar_lea.vmem %s4, 176
      %v1193 = vld [vmem:[%s1192] sm:$0x7f]
      %v1194 = vld [vmem:[%s1192 + $0x8] sm:$0x7f]
      %1196 = vrot.lane.b32.xlu0 %v1134, 112
      %v1197 = vpop.permute.xlu0 %1196
      %1198 = vrot.lane.b32.xlu0 %v1135, 112
      %v1199 = vpop.permute.xlu0 %1198
      %1200 = vrot.lane.b32.xlu0 %v1191, 112
      %v1201 = vpop.permute.xlu0 %1200
      %v1202 = vsel %vm747, %v1197, %v1199
      %v1203 = vsel %vm747, %v1199, %v1201
      %v1206 = vmul.f32 %v1193, %v1202
      %v1207 = vmul.f32 %v1194, %v1203
      %v1208 = vadd.f32 %v1167, %v1206
      %v1209 = vadd.f32 %v1168, %v1207
      %s1210 = scalar_lea.vmem %s4, 192
      %v1211 = vld [vmem:[%s1210] sm:$0x7f]
      %v1212 = vld [vmem:[%s1210 + $0x8] sm:$0x7f]
      %1213 = vrot.lane.b32.xlu0 %v1134, 96
      %v1214 = vpop.permute.xlu0 %1213
      %1215 = vrot.lane.b32.xlu0 %v1135, 96
      %v1216 = vpop.permute.xlu0 %1215
      %1217 = vrot.lane.b32.xlu0 %v1191, 96
      %v1218 = vpop.permute.xlu0 %1217
      %v1219 = vsel %vm765, %v1214, %v1216
      %v1220 = vsel %vm765, %v1216, %v1218
      %v1223 = vmul.f32 %v1211, %v1219
      %v1224 = vmul.f32 %v1212, %v1220
      %v1225 = vadd.f32 %v1182, %v1223
      %v1226 = vadd.f32 %v1183, %v1224
      %s1227 = scalar_lea.vmem %s4, 208
      %v1228 = vld [vmem:[%s1227] sm:$0x7f]
      %v1229 = vld [vmem:[%s1227 + $0x8] sm:$0x7f]
      %1230 = vrot.lane.b32.xlu0 %v1134, 80
      %v1231 = vpop.permute.xlu0 %1230
      %1232 = vrot.lane.b32.xlu0 %v1135, 80
      %v1233 = vpop.permute.xlu0 %1232
      %1234 = vrot.lane.b32.xlu0 %v1191, 80
      %v1235 = vpop.permute.xlu0 %1234
      %v1236 = vsel %vm783, %v1231, %v1233
      %v1237 = vsel %vm783, %v1233, %v1235
      %v1240 = vmul.f32 %v1228, %v1236
      %v1241 = vmul.f32 %v1229, %v1237
      %v1242 = vadd.f32 %v1189, %v1240
      %v1243 = vadd.f32 %v1190, %v1241
      %v1244 = vadd.f32 %v1242, %v1208
      %v1245 = vadd.f32 %v1243, %v1209
      %v1246 = vadd.f32 %v1244, %v1225
      %v1247 = vadd.f32 %v1245, %v1226
      %v1248 = vsel %vm796, %v1246, 0.0
      %v1249 = vrot.slane %v1248, 4
      %v1250 = vadd.f32 %v1248, %v1249
      %v1251 = vrot.slane %v1250, 2
      %v1252 = vadd.f32 %v1250, %v1251
      %v1253 = vrot.slane %v1252, 1
      %v1254 = vadd.f32 %v1252, %v1253
      %v1255 = vsel %vm796, %v1247, 0.0
      %v1256 = vrot.slane %v1255, 4
      %v1257 = vadd.f32 %v1255, %v1256
      %v1258 = vrot.slane %v1257, 2
      %v1259 = vadd.f32 %v1257, %v1258
      %v1260 = vrot.slane %v1259, 1
      %v1261 = vadd.f32 %v1259, %v1260
      %v1262 = vmul.f32 %v1254, 0.5
      %v1263 = vmul.f32 %v1261, 0.5
      %v1264 = vtanh.pop %v1262
      %v1265 = vtanh.pop %v1263
      %v1266 = vadd.f32 %v1264, 1.0
      %v1267 = vadd.f32 %v1265, 1.0
      %v1268 = vmul.f32 %v1266, 0.5
      %v1269 = vmul.f32 %v1267, 0.5
      %v1270 = vmul.f32 %v1030, %v1268
      %v1271 = vmul.f32 %v1031, %v1269
      %v1272 = vmul.f32 %v1032, %v1268
      %v1273 = vmul.f32 %v1033, %v1269
      %v1274 = vmul.f32 %v1034, %v1268
      %v1275 = vmul.f32 %v1035, %v1269
      %v1276 = vmul.f32 %v1036, %v1268
      %v1277 = vmul.f32 %v1037, %v1269
      %v1278 = vmul.f32 %v1038, %v1268
      %v1279 = vmul.f32 %v1039, %v1269
      %v1280 = vmul.f32 %v1040, %v1268
      %v1281 = vmul.f32 %v1041, %v1269
      %v1282 = vmul.f32 %v1042, %v1268
      %v1283 = vmul.f32 %v1043, %v1269
      %v1284 = vmul.f32 %v1044, %v1268
      %v1285 = vmul.f32 %v1045, %v1269
      %1286 = vst [vmem:[%s365] sm:$0xff] %v1270
      %1287 = vst [vmem:[%s365 + $0x8] sm:$0xff] %v1271
      %1288 = vst [vmem:[%s365 + $0x10] sm:$0xff] %v1272
      %1289 = vst [vmem:[%s365 + $0x18] sm:$0xff] %v1273
      %1290 = vst [vmem:[%s365 + $0x20] sm:$0xff] %v1274
      %1291 = vst [vmem:[%s365 + $0x28] sm:$0xff] %v1275
      %1292 = vst [vmem:[%s365 + $0x30] sm:$0xff] %v1276
      %1293 = vst [vmem:[%s365 + $0x38] sm:$0xff] %v1277
      %1294 = vst [vmem:[%s365 + $0x40] sm:$0xff] %v1278
      %1295 = vst [vmem:[%s365 + $0x48] sm:$0xff] %v1279
      %1296 = vst [vmem:[%s365 + $0x50] sm:$0xff] %v1280
      %1297 = vst [vmem:[%s365 + $0x58] sm:$0xff] %v1281
      %1298 = vst [vmem:[%s365 + $0x60] sm:$0xff] %v1282
      %1299 = vst [vmem:[%s365 + $0x68] sm:$0xff] %v1283
      %1300 = vst [vmem:[%s365 + $0x70] sm:$0xff] %v1284
      %1301 = vst [vmem:[%s365 + $0x78] sm:$0xff] %v1285
      %v1302 = vld [vmem:[%s355] sm:$0xff]
      %v1303 = vld [vmem:[%s355 + $0x8] sm:$0xff]
      %v1304 = vld [vmem:[%s355 + $0x10] sm:$0xff]
      %v1305 = vld [vmem:[%s355 + $0x18] sm:$0xff]
      %v1306 = vld [vmem:[%s355 + $0x20] sm:$0xff]
      %v1307 = vld [vmem:[%s355 + $0x28] sm:$0xff]
      %v1308 = vld [vmem:[%s355 + $0x30] sm:$0xff]
      %v1309 = vld [vmem:[%s355 + $0x38] sm:$0xff]
      %v1310 = vld [vmem:[%s3] sm:$0xff]
      %v1311 = vld [vmem:[%s3 + $0x8] sm:$0xff]
      %v1312 = vld [vmem:[%s3 + $0x10] sm:$0xff]
      %v1313 = vld [vmem:[%s3 + $0x18] sm:$0xff]
      %v1314 = vld [vmem:[%s3 + $0x20] sm:$0xff]
      %v1315 = vld [vmem:[%s3 + $0x28] sm:$0xff]
      %v1316 = vld [vmem:[%s3 + $0x30] sm:$0xff]
      %v1317 = vld [vmem:[%s3 + $0x38] sm:$0xff]
      %vm1318 = vcmask 523264
      %v1319 = vsel %vm1318, %v1302, -inf
      %1320 = vmax.xlane.f32.xlu0 %v1319
      %v1321 = vpop.xlane.xlu0 %1320
      %v1322 = vsel %vm1318, %v1303, -inf
      %1323 = vmax.xlane.f32.xlu0 %v1322
      %v1324 = vpop.xlane.xlu0 %1323
      %v1325 = vsel %vm1318, %v1304, -inf
      %1326 = vmax.xlane.f32.xlu0 %v1325
      %v1327 = vpop.xlane.xlu0 %1326
      %v1328 = vsel %vm1318, %v1305, -inf
      %1329 = vmax.xlane.f32.xlu0 %v1328
      %v1330 = vpop.xlane.xlu0 %1329
      %v1331 = vsel %vm1318, %v1306, -inf
      %1332 = vmax.xlane.f32.xlu0 %v1331
      %v1333 = vpop.xlane.xlu0 %1332
      %v1334 = vsel %vm1318, %v1307, -inf
      %1335 = vmax.xlane.f32.xlu0 %v1334
      %v1336 = vpop.xlane.xlu0 %1335
      %v1337 = vsel %vm1318, %v1308, -inf
      %1338 = vmax.xlane.f32.xlu0 %v1337
      %v1339 = vpop.xlane.xlu0 %1338
      %v1340 = vsel %vm1318, %v1309, -inf
      %1341 = vmax.xlane.f32.xlu0 %v1340
      %v1342 = vpop.xlane.xlu0 %1341
      %v1343 = vmul.f32 %v1310, %v1321
      %v1344 = vmul.f32 %v1311, %v1324
      %v1345 = vmul.f32 %v1312, %v1327
      %v1346 = vmul.f32 %v1313, %v1330
      %v1347 = vmul.f32 %v1314, %v1333
      %v1348 = vmul.f32 %v1315, %v1336
      %v1349 = vmul.f32 %v1316, %v1339
      %v1350 = vmul.f32 %v1317, %v1342
      %vm1351 = vcmask 162944
      %v1352 = vsel %vm1351, %v1343, 0.0
      %v1353 = vsel %vm1351, %v1344, 0.0
      %v1354 = vadd.f32 %v1352, %v1353
      %v1355 = vsel %vm1351, %v1345, 0.0
      %v1356 = vadd.f32 %v1354, %v1355
      %v1357 = vsel %vm1351, %v1346, 0.0
      %v1358 = vadd.f32 %v1356, %v1357
      %v1359 = vsel %vm1351, %v1347, 0.0
      %v1360 = vadd.f32 %v1358, %v1359
      %v1361 = vsel %vm1351, %v1348, 0.0
      %v1362 = vadd.f32 %v1360, %v1361
      %v1363 = vsel %vm1351, %v1349, 0.0
      %v1364 = vadd.f32 %v1362, %v1363
      %v1365 = vsel %vm1351, %v1350, 0.0
      %v1366 = vadd.f32 %v1364, %v1365
      %v1367 = vrot.slane %v1366, 4
      %v1368 = vadd.f32 %v1366, %v1367
      %v1369 = vrot.slane %v1368, 2
      %v1370 = vadd.f32 %v1368, %v1369
      %v1371 = vrot.slane %v1370, 1
      %v1372 = vadd.f32 %v1370, %v1371
      %v1373 = vmax.f32 %v1372, 0.0
      %1375 = vrot.lane.b32.xlu0 %v1373, 4
      %v1376 = vpop.permute.xlu0 %1375
      %v1378 = vmul.f32 %v1310, %v1376
      %v1379 = vmul.f32 %v1311, %v1376
      %v1380 = vmul.f32 %v1312, %v1376
      %v1381 = vmul.f32 %v1313, %v1376
      %v1382 = vmul.f32 %v1314, %v1376
      %v1383 = vmul.f32 %v1315, %v1376
      %v1384 = vmul.f32 %v1316, %v1376
      %v1385 = vmul.f32 %v1317, %v1376
      %1394 = vrot.lane.b32.xlu0 %v1378, 108
      %v1395 = vpop.permute.xlu0 %1394
      %1396 = vrot.lane.b32.xlu0 %v1379, 108
      %v1397 = vpop.permute.xlu0 %1396
      %1398 = vrot.lane.b32.xlu0 %v1380, 108
      %v1399 = vpop.permute.xlu0 %1398
      %1400 = vrot.lane.b32.xlu0 %v1381, 108
      %v1401 = vpop.permute.xlu0 %1400
      %1402 = vrot.lane.b32.xlu0 %v1382, 108
      %v1403 = vpop.permute.xlu0 %1402
      %1404 = vrot.lane.b32.xlu0 %v1383, 108
      %v1405 = vpop.permute.xlu0 %1404
      %1406 = vrot.lane.b32.xlu0 %v1384, 108
      %v1407 = vpop.permute.xlu0 %1406
      %1408 = vrot.lane.b32.xlu0 %v1385, 108
      %v1409 = vpop.permute.xlu0 %1408
      %v1418 = vsel %vm431, %v1395, 0.0
      %1419 = vadd.xlane.f32.xlu0 %v1418
      %v1420 = vpop.xlane.xlu0 %1419
      %v1421 = vsel %vm431, %v1397, 0.0
      %1422 = vadd.xlane.f32.xlu0 %v1421
      %v1423 = vpop.xlane.xlu0 %1422
      %v1424 = vsel %vm431, %v1399, 0.0
      %1425 = vadd.xlane.f32.xlu0 %v1424
      %v1426 = vpop.xlane.xlu0 %1425
      %v1427 = vsel %vm431, %v1401, 0.0
      %1428 = vadd.xlane.f32.xlu0 %v1427
      %v1429 = vpop.xlane.xlu0 %1428
      %v1430 = vsel %vm431, %v1403, 0.0
      %1431 = vadd.xlane.f32.xlu0 %v1430
      %v1432 = vpop.xlane.xlu0 %1431
      %v1433 = vsel %vm431, %v1405, 0.0
      %1434 = vadd.xlane.f32.xlu0 %v1433
      %v1435 = vpop.xlane.xlu0 %1434
      %v1436 = vsel %vm431, %v1407, 0.0
      %1437 = vadd.xlane.f32.xlu0 %v1436
      %v1438 = vpop.xlane.xlu0 %1437
      %v1439 = vsel %vm431, %v1409, 0.0
      %1440 = vadd.xlane.f32.xlu0 %v1439
      %v1441 = vpop.xlane.xlu0 %1440
      %v1442 = vmul.f32 %v1420, 0.5
      %v1443 = vmul.f32 %v1423, 0.5
      %v1444 = vmul.f32 %v1426, 0.5
      %v1445 = vmul.f32 %v1429, 0.5
      %v1446 = vmul.f32 %v1432, 0.5
      %v1447 = vmul.f32 %v1435, 0.5
      %v1448 = vmul.f32 %v1438, 0.5
      %v1449 = vmul.f32 %v1441, 0.5
      %v1450 = vtanh.pop %v1442
      %v1451 = vtanh.pop %v1443
      %v1452 = vtanh.pop %v1444
      %v1453 = vtanh.pop %v1445
      %v1454 = vtanh.pop %v1446
      %v1455 = vtanh.pop %v1447
      %v1456 = vtanh.pop %v1448
      %v1457 = vtanh.pop %v1449
      %v1458 = vadd.f32 %v1450, 1.0
      %v1459 = vadd.f32 %v1451, 1.0
      %v1460 = vadd.f32 %v1452, 1.0
      %v1461 = vadd.f32 %v1453, 1.0
      %v1462 = vadd.f32 %v1454, 1.0
      %v1463 = vadd.f32 %v1455, 1.0
      %v1464 = vadd.f32 %v1456, 1.0
      %v1465 = vadd.f32 %v1457, 1.0
      %v1466 = vmul.f32 %v1458, 0.5
      %v1467 = vmul.f32 %v1459, 0.5
      %v1468 = vmul.f32 %v1460, 0.5
      %v1469 = vmul.f32 %v1461, 0.5
      %v1470 = vmul.f32 %v1462, 0.5
      %v1471 = vmul.f32 %v1463, 0.5
      %v1472 = vmul.f32 %v1464, 0.5
      %v1473 = vmul.f32 %v1465, 0.5
      %vm1474 = vcmask 1048064
      %v1475 = vsel %vm1474, %v1302, -inf
      %1476 = vmax.xlane.f32.xlu0 %v1475
      %v1477 = vpop.xlane.xlu0 %1476
      %v1478 = vsel %vm1474, %v1303, -inf
      %1479 = vmax.xlane.f32.xlu0 %v1478
      %v1480 = vpop.xlane.xlu0 %1479
      %v1481 = vsel %vm1474, %v1304, -inf
      %1482 = vmax.xlane.f32.xlu0 %v1481
      %v1483 = vpop.xlane.xlu0 %1482
      %v1484 = vsel %vm1474, %v1305, -inf
      %1485 = vmax.xlane.f32.xlu0 %v1484
      %v1486 = vpop.xlane.xlu0 %1485
      %v1487 = vsel %vm1474, %v1306, -inf
      %1488 = vmax.xlane.f32.xlu0 %v1487
      %v1489 = vpop.xlane.xlu0 %1488
      %v1490 = vsel %vm1474, %v1307, -inf
      %1491 = vmax.xlane.f32.xlu0 %v1490
      %v1492 = vpop.xlane.xlu0 %1491
      %v1493 = vsel %vm1474, %v1308, -inf
      %1494 = vmax.xlane.f32.xlu0 %v1493
      %v1495 = vpop.xlane.xlu0 %1494
      %v1496 = vsel %vm1474, %v1309, -inf
      %1497 = vmax.xlane.f32.xlu0 %v1496
      %v1498 = vpop.xlane.xlu0 %1497
      %v1499 = vmul.f32 %v1310, %v1477
      %v1500 = vmul.f32 %v1311, %v1480
      %v1501 = vmul.f32 %v1312, %v1483
      %v1502 = vmul.f32 %v1313, %v1486
      %v1503 = vmul.f32 %v1314, %v1489
      %v1504 = vmul.f32 %v1315, %v1492
      %v1505 = vmul.f32 %v1316, %v1495
      %v1506 = vmul.f32 %v1317, %v1498
      %vm1507 = vcmask 228544
      %v1508 = vsel %vm1507, %v1499, 0.0
      %v1509 = vsel %vm1507, %v1500, 0.0
      %v1510 = vadd.f32 %v1508, %v1509
      %v1511 = vsel %vm1507, %v1501, 0.0
      %v1512 = vadd.f32 %v1510, %v1511
      %v1513 = vsel %vm1507, %v1502, 0.0
      %v1514 = vadd.f32 %v1512, %v1513
      %v1515 = vsel %vm1507, %v1503, 0.0
      %v1516 = vadd.f32 %v1514, %v1515
      %v1517 = vsel %vm1507, %v1504, 0.0
      %v1518 = vadd.f32 %v1516, %v1517
      %v1519 = vsel %vm1507, %v1505, 0.0
      %v1520 = vadd.f32 %v1518, %v1519
      %v1521 = vsel %vm1507, %v1506, 0.0
      %v1522 = vadd.f32 %v1520, %v1521
      %v1523 = vrot.slane %v1522, 4
      %v1524 = vadd.f32 %v1522, %v1523
      %v1525 = vrot.slane %v1524, 2
      %v1526 = vadd.f32 %v1524, %v1525
      %v1527 = vrot.slane %v1526, 1
      %v1528 = vadd.f32 %v1526, %v1527
      %v1529 = vmax.f32 %v1528, 0.0
      %1531 = vrot.lane.b32.xlu0 %v1529, 4
      %v1532 = vpop.permute.xlu0 %1531
      %v1534 = vmul.f32 %v1310, %v1532
      %v1535 = vmul.f32 %v1311, %v1532
      %v1536 = vmul.f32 %v1312, %v1532
      %v1537 = vmul.f32 %v1313, %v1532
      %v1538 = vmul.f32 %v1314, %v1532
      %v1539 = vmul.f32 %v1315, %v1532
      %v1540 = vmul.f32 %v1316, %v1532
      %v1541 = vmul.f32 %v1317, %v1532
      %1550 = vrot.lane.b32.xlu0 %v1534, 100
      %v1551 = vpop.permute.xlu0 %1550
      %1552 = vrot.lane.b32.xlu0 %v1535, 100
      %v1553 = vpop.permute.xlu0 %1552
      %1554 = vrot.lane.b32.xlu0 %v1536, 100
      %v1555 = vpop.permute.xlu0 %1554
      %1556 = vrot.lane.b32.xlu0 %v1537, 100
      %v1557 = vpop.permute.xlu0 %1556
      %1558 = vrot.lane.b32.xlu0 %v1538, 100
      %v1559 = vpop.permute.xlu0 %1558
      %1560 = vrot.lane.b32.xlu0 %v1539, 100
      %v1561 = vpop.permute.xlu0 %1560
      %1562 = vrot.lane.b32.xlu0 %v1540, 100
      %v1563 = vpop.permute.xlu0 %1562
      %1564 = vrot.lane.b32.xlu0 %v1541, 100
      %v1565 = vpop.permute.xlu0 %1564
      %v1574 = vsel %vm431, %v1551, 0.0
      %1575 = vadd.xlane.f32.xlu0 %v1574
      %v1576 = vpop.xlane.xlu0 %1575
      %v1577 = vsel %vm431, %v1553, 0.0
      %1578 = vadd.xlane.f32.xlu0 %v1577
      %v1579 = vpop.xlane.xlu0 %1578
      %v1580 = vsel %vm431, %v1555, 0.0
      %1581 = vadd.xlane.f32.xlu0 %v1580
      %v1582 = vpop.xlane.xlu0 %1581
      %v1583 = vsel %vm431, %v1557, 0.0
      %1584 = vadd.xlane.f32.xlu0 %v1583
      %v1585 = vpop.xlane.xlu0 %1584
      %v1586 = vsel %vm431, %v1559, 0.0
      %1587 = vadd.xlane.f32.xlu0 %v1586
      %v1588 = vpop.xlane.xlu0 %1587
      %v1589 = vsel %vm431, %v1561, 0.0
      %1590 = vadd.xlane.f32.xlu0 %v1589
      %v1591 = vpop.xlane.xlu0 %1590
      %v1592 = vsel %vm431, %v1563, 0.0
      %1593 = vadd.xlane.f32.xlu0 %v1592
      %v1594 = vpop.xlane.xlu0 %1593
      %v1595 = vsel %vm431, %v1565, 0.0
      %1596 = vadd.xlane.f32.xlu0 %v1595
      %v1597 = vpop.xlane.xlu0 %1596
      %v1598 = vmul.f32 %v1576, 0.5
      %v1599 = vmul.f32 %v1579, 0.5
      %v1600 = vmul.f32 %v1582, 0.5
      %v1601 = vmul.f32 %v1585, 0.5
      %v1602 = vmul.f32 %v1588, 0.5
      %v1603 = vmul.f32 %v1591, 0.5
      %v1604 = vmul.f32 %v1594, 0.5
      %v1605 = vmul.f32 %v1597, 0.5
      %v1606 = vtanh.pop %v1598
      %v1607 = vtanh.pop %v1599
      %v1608 = vtanh.pop %v1600
      %v1609 = vtanh.pop %v1601
      %v1610 = vtanh.pop %v1602
      %v1611 = vtanh.pop %v1603
      %v1612 = vtanh.pop %v1604
      %v1613 = vtanh.pop %v1605
      %v1614 = vadd.f32 %v1606, 1.0
      %v1615 = vadd.f32 %v1607, 1.0
      %v1616 = vadd.f32 %v1608, 1.0
      %v1617 = vadd.f32 %v1609, 1.0
      %v1618 = vadd.f32 %v1610, 1.0
      %v1619 = vadd.f32 %v1611, 1.0
      %v1620 = vadd.f32 %v1612, 1.0
      %v1621 = vadd.f32 %v1613, 1.0
      %v1622 = vmul.f32 %v1614, 0.5
      %v1623 = vmul.f32 %v1615, 0.5
      %v1624 = vmul.f32 %v1616, 0.5
      %v1625 = vmul.f32 %v1617, 0.5
      %v1626 = vmul.f32 %v1618, 0.5
      %v1627 = vmul.f32 %v1619, 0.5
      %v1628 = vmul.f32 %v1620, 0.5
      %v1629 = vmul.f32 %v1621, 0.5
      %v1630 = vlaneseq
      %v1631 = vand.u32 %v1630, 127
      %vm1632 = vcmp.lt.s32.totalorder %v1631, 64
      %v1633 = vsel %vm1632, 1, 0
      %v1634 = vcvt.s32.f32 %v1633
      %v1635 = vmul.f32 %v1466, %v1634
      %v1636 = vmul.f32 %v1467, %v1634
      %v1637 = vmul.f32 %v1468, %v1634
      %v1638 = vmul.f32 %v1469, %v1634
      %v1639 = vmul.f32 %v1470, %v1634
      %v1640 = vmul.f32 %v1471, %v1634
      %v1641 = vmul.f32 %v1472, %v1634
      %v1642 = vmul.f32 %v1473, %v1634
      %v1643 = vsub.f32 1.0, %v1634
      %v1644 = vmul.f32 %v1622, %v1643
      %v1645 = vmul.f32 %v1623, %v1643
      %v1646 = vmul.f32 %v1624, %v1643
      %v1647 = vmul.f32 %v1625, %v1643
      %v1648 = vmul.f32 %v1626, %v1643
      %v1649 = vmul.f32 %v1627, %v1643
      %v1650 = vmul.f32 %v1628, %v1643
      %v1651 = vmul.f32 %v1629, %v1643
      %v1652 = vadd.f32 %v1635, %v1644
      %v1653 = vadd.f32 %v1636, %v1645
      %v1654 = vadd.f32 %v1637, %v1646
      %v1655 = vadd.f32 %v1638, %v1647
      %v1656 = vadd.f32 %v1639, %v1648
      %v1657 = vadd.f32 %v1640, %v1649
      %v1658 = vadd.f32 %v1641, %v1650
      %v1659 = vadd.f32 %v1642, %v1651
      %v1660 = vmul.f32 %v1302, %v1652
      %v1661 = vmul.f32 %v1303, %v1653
      %v1662 = vmul.f32 %v1304, %v1654
      %v1663 = vmul.f32 %v1305, %v1655
      %v1664 = vmul.f32 %v1306, %v1656
      %v1665 = vmul.f32 %v1307, %v1657
      %v1666 = vmul.f32 %v1308, %v1658
      %v1667 = vmul.f32 %v1309, %v1659
      %v1668 = vmax.f32 %v1660, %v1664
      %v1669 = vmax.f32 %v1661, %v1665
      %v1670 = vmax.f32 %v1662, %v1666
      %v1671 = vmax.f32 %v1663, %v1667
      %v1672 = vmax.f32 %v1668, %v1669
      %v1673 = vmax.f32 %v1670, %v1671
      %v1674 = vmax.f32 %v1672, %v1673
      %v1675 = vrot.slane %v1674, 4
      %v1676 = vmax.f32 %v1674, %v1675
      %v1677 = vrot.slane %v1676, 2
      %v1678 = vmax.f32 %v1676, %v1677
      %v1679 = vrot.slane %v1678, 1
      %v1680 = vmax.f32 %v1678, %v1679
      %1681 = vst [vmem:[#allocation2 + $0xb] sm:$0x1] %v1680
      %v1682 = vld [vmem:[#allocation2 + $0x3] ss:$0 sm:$0xff]
      %v1683 = vld [vmem:[#allocation2 + $0xb] ss:$0 sm:$0xff]
      %1686 = vrot.lane.b32.xlu0 %v1682, 3
      %v1687 = vpop.permute.xlu0 %1686
      %1688 = vrot.lane.b32.xlu0 %v1683, 3
      %v1689 = vpop.permute.xlu0 %1688
      %v1690 = vsel %vm615, %v1687, %v1689
      %1692 = vst [vmem:[#allocation2 + $0x8] sm:$0x1] %v1690
      %v1693 = vld [vmem:[#allocation2 + $0x3] ss:$0 sm:$0xff]
      %v1694 = vld [vmem:[#allocation2 + $0xb] ss:$0 sm:$0xff]
      %1697 = vrot.lane.b32.xlu0 %v1693, 2
      %v1698 = vpop.permute.xlu0 %1697
      %1699 = vrot.lane.b32.xlu0 %v1694, 2
      %v1700 = vpop.permute.xlu0 %1699
      %v1701 = vsel %vm626, %v1698, %v1700
      %1703 = vst [vmem:[#allocation2 + $0x9] sm:$0x1] %v1701
      %v1704 = vld [vmem:[#allocation2 + $0x3] ss:$0 sm:$0xff]
      %v1705 = vld [vmem:[#allocation2 + $0xb] ss:$0 sm:$0xff]
      %1708 = vrot.lane.b32.xlu0 %v1704, 1
      %v1709 = vpop.permute.xlu0 %1708
      %1710 = vrot.lane.b32.xlu0 %v1705, 1
      %v1711 = vpop.permute.xlu0 %1710
      %v1712 = vsel %vm637, %v1709, %v1711
      %1714 = vst [vmem:[#allocation2 + $0xa] sm:$0x1] %v1712
      %v1715 = vld [vmem:[#allocation2 + $0xb] ss:$0 sm:$0xff]
      %v1716 = vld [vmem:[#allocation2 + $0x13] ss:$0 sm:$0xff]
      %1719 = vrot.lane.b32.xlu0 %v1715, 127
      %v1720 = vpop.permute.xlu0 %1719
      %1721 = vrot.lane.b32.xlu0 %v1716, 127
      %v1722 = vpop.permute.xlu0 %1721
      %v1723 = vsel %vm648, %v1720, %v1722
      %1725 = vst [vmem:[#allocation2 + $0xc] sm:$0x1] %v1723
      %v1726 = vld [vmem:[#allocation2 + $0xb] ss:$0 sm:$0xff]
      %v1727 = vld [vmem:[#allocation2 + $0x13] ss:$0 sm:$0xff]
      %1730 = vrot.lane.b32.xlu0 %v1726, 126
      %v1731 = vpop.permute.xlu0 %1730
      %1732 = vrot.lane.b32.xlu0 %v1727, 126
      %v1733 = vpop.permute.xlu0 %1732
      %v1734 = vsel %vm659, %v1731, %v1733
      %1736 = vst [vmem:[#allocation2 + $0xd] sm:$0x1] %v1734
      %v1737 = vld [vmem:[#allocation2 + $0xb] ss:$0 sm:$0xff]
      %v1738 = vld [vmem:[#allocation2 + $0x13] ss:$0 sm:$0xff]
      %1741 = vrot.lane.b32.xlu0 %v1737, 125
      %v1742 = vpop.permute.xlu0 %1741
      %1743 = vrot.lane.b32.xlu0 %v1738, 125
      %v1744 = vpop.permute.xlu0 %1743
      %v1745 = vsel %vm670, %v1742, %v1744
      %1747 = vst [vmem:[#allocation2 + $0xe] sm:$0x1] %v1745
      %v1748 = vld [vmem:[#allocation2] sm:$0x7f]
      %v1749 = vld [vmem:[#allocation2 + $0x8] sm:$0x7f]
      %v1750 = vld [vmem:[%s5] sm:$0x7f]
      %1753 = vrot.lane.b32.xlu0 %v1748, 24
      %v1754 = vpop.permute.xlu0 %1753
      %1755 = vrot.lane.b32.xlu0 %v1749, 24
      %v1756 = vpop.permute.xlu0 %1755
      %vm1757 = vcmask 195584
      %v1758 = vsel %vm1757, %v1754, %v1756
      %v1760 = vmul.f32 %v1750, %v1758
      %s1761 = scalar_lea.vmem %s5, 8
      %v1762 = vld [vmem:[%s1761] sm:$0x7f]
      %1763 = vrot.lane.b32.xlu0 %v1748, 16
      %v1764 = vpop.permute.xlu0 %1763
      %1765 = vrot.lane.b32.xlu0 %v1749, 16
      %v1766 = vpop.permute.xlu0 %1765
      %v1767 = vsel %vm722, %v1764, %v1766
      %v1769 = vmul.f32 %v1762, %v1767
      %s1770 = scalar_lea.vmem %s5, 16
      %v1771 = vld [vmem:[%s1770] sm:$0x7f]
      %1772 = vrot.lane.b32.xlu0 %v1748, 8
      %v1773 = vpop.permute.xlu0 %1772
      %1774 = vrot.lane.b32.xlu0 %v1749, 8
      %v1775 = vpop.permute.xlu0 %1774
      %vm1776 = vcmask 64512
      %v1777 = vsel %vm1776, %v1773, %v1775
      %v1779 = vmul.f32 %v1771, %v1777
      %s1780 = scalar_lea.vmem %s5, 24
      %v1781 = vld [vmem:[%s1780] sm:$0x7f]
      %v1782 = vmul.f32 %v1781, %v1749
      %v1783 = vadd.f32 %v1760, %v1782
      %v1784 = vld [vmem:[#allocation2 + $0x10] sm:$0x7f]
      %s1785 = scalar_lea.vmem %s5, 32
      %v1786 = vld [vmem:[%s1785] sm:$0x7f]
      %1788 = vrot.lane.b32.xlu0 %v1749, 120
      %v1789 = vpop.permute.xlu0 %1788
      %1790 = vrot.lane.b32.xlu0 %v1784, 120
      %v1791 = vpop.permute.xlu0 %1790
      %vm1792 = vcmask 982016
      %v1793 = vsel %vm1792, %v1789, %v1791
      %v1795 = vmul.f32 %v1786, %v1793
      %v1796 = vadd.f32 %v1769, %v1795
      %s1797 = scalar_lea.vmem %s5, 40
      %v1798 = vld [vmem:[%s1797] sm:$0x7f]
      %1799 = vrot.lane.b32.xlu0 %v1749, 112
      %v1800 = vpop.permute.xlu0 %1799
      %1801 = vrot.lane.b32.xlu0 %v1784, 112
      %v1802 = vpop.permute.xlu0 %1801
      %v1803 = vsel %vm747, %v1800, %v1802
      %v1805 = vmul.f32 %v1798, %v1803
      %v1806 = vadd.f32 %v1779, %v1805
      %s1807 = scalar_lea.vmem %s5, 48
      %v1808 = vld [vmem:[%s1807] sm:$0x7f]
      %1809 = vrot.lane.b32.xlu0 %v1749, 104
      %v1810 = vpop.permute.xlu0 %1809
      %1811 = vrot.lane.b32.xlu0 %v1784, 104
      %v1812 = vpop.permute.xlu0 %1811
      %vm1813 = vcmask 850944
      %v1814 = vsel %vm1813, %v1810, %v1812
      %v1816 = vmul.f32 %v1808, %v1814
      %v1817 = vadd.f32 %v1783, %v1816
      %v1818 = vadd.f32 %v1817, %v1796
      %v1819 = vadd.f32 %v1818, %v1806
      %v1820 = vsel %vm796, %v1819, 0.0
      %v1821 = vrot.slane %v1820, 4
      %v1822 = vadd.f32 %v1820, %v1821
      %v1823 = vrot.slane %v1822, 2
      %v1824 = vadd.f32 %v1822, %v1823
      %v1825 = vrot.slane %v1824, 1
      %v1826 = vadd.f32 %v1824, %v1825
      %v1827 = vmul.f32 %v1826, 0.5
      %v1828 = vtanh.pop %v1827
      %v1829 = vadd.f32 %v1828, 1.0
      %v1830 = vmul.f32 %v1829, 0.5
      %v1831 = vmul.f32 %v1660, %v1830
      %v1832 = vmul.f32 %v1661, %v1830
      %v1833 = vmul.f32 %v1662, %v1830
      %v1834 = vmul.f32 %v1663, %v1830
      %v1835 = vmul.f32 %v1664, %v1830
      %v1836 = vmul.f32 %v1665, %v1830
      %v1837 = vmul.f32 %v1666, %v1830
      %v1838 = vmul.f32 %v1667, %v1830
      %1839 = vst [vmem:[%s370] sm:$0xff] %v1831
      %1840 = vst [vmem:[%s370 + $0x8] sm:$0xff] %v1832
      %1841 = vst [vmem:[%s370 + $0x10] sm:$0xff] %v1833
      %1842 = vst [vmem:[%s370 + $0x18] sm:$0xff] %v1834
      %1843 = vst [vmem:[%s370 + $0x20] sm:$0xff] %v1835
      %1844 = vst [vmem:[%s370 + $0x28] sm:$0xff] %v1836
      %1845 = vst [vmem:[%s370 + $0x30] sm:$0xff] %v1837
      %1846 = vst [vmem:[%s370 + $0x38] sm:$0xff] %v1838
      %p1847 = scmp.lt.s32.totalorder %s20, 1
      %s1848 = scalar_select %p1847, %s20, 1
      %s1849 = smul.addr %s1848, 16
      %s1850 = smul.addr %s1849, 8
      %s1851 = scalar_lea.vmem %s6, %s1850
      %p1852 = scmp.lt.s32.totalorder %s20, 1
      %s1853 = scalar_select %p1852, %s20, 1
      %s1854 = smul.addr %s1853, 16
      %s1855 = smul.addr %s1854, 8
      %s1856 = scalar_lea.vmem %s7, %s1855
      %p1857 = scmp.lt.s32.totalorder %s20, 1
      %s1858 = scalar_select %p1857, %s20, 1
      %s1859 = smul.addr %s1858, 8
      %s1860 = smul.addr %s1859, 8
      %s1861 = scalar_lea.vmem %s8, %s1860
      // Predicated region
      $region45: #{attention_forward.1} parent=43 // pred_check
        %p1862 = pneg %p179
      $region46: #{attention_forward.1} parent=43 // pred_check_branch
        %1864 = sbr.rel (%p1862) target = $region48
      $region47: #{attention_forward.1} parent=43 // pred_region
        _
      $region48: #{attention_forward.1} parent=43 // pred_fallthru
        _
      // Predicated region
      $region49: #{attention_forward.1} parent=43 // pred_check
        %p1865 = pneg %p205
      $region50: #{attention_forward.1} parent=43 // pred_check_branch
        %1867 = sbr.rel (%p1865) target = $region52
      $region51: #{attention_forward.1} parent=43 // pred_region
        _
      $region52: #{attention_forward.1} parent=43 // pred_fallthru
        _
      // Predicated region
      $region53: #{attention_forward.1} parent=43 // pred_check
        %p1868 = pneg %p231
      $region54: #{attention_forward.1} parent=43 // pred_check_branch
        %1870 = sbr.rel (%p1868) target = $region56
      $region55: #{attention_forward.1} parent=43 // pred_region
        _
      $region56: #{attention_forward.1} parent=43 // pred_fallthru
        _
    $region44: #{attention_forward.1} parent=5 // pred_fallthru
      _
    %p1871 = scmp.le.s32.totalorder 2, %s15
    // Predicated region
    $region57: #{attention_forward.1} parent=5 // pred_check
      %p1872 = pneg %p1871
    $region58: #{attention_forward.1} parent=5 // pred_check_branch
      %1874 = sbr.rel (%p1872) target = $region60
    $region59: #{attention_forward.1} parent=5 // pred_region
      %s1875 = ssub.s32 %s15, 2
      // Predicated region
      $region61: #{attention_forward.1} parent=59 // pred_check
        %p1876 = pneg %p185
      $region62: #{attention_forward.1} parent=59 // pred_check_branch
        %1878 = sbr.rel (%p1876) target = $region64
      $region63: #{attention_forward.1} parent=59 // pred_region
        %p1879 = scmp.lt.s32.totalorder %s21, 1
        %s1880 = scalar_select %p1879, %s21, 1
        %s1881 = smul.addr %s1880, 16
        %s1882 = smul.addr %s1881, 8
        %s1883 = scalar_lea.vmem %s6, %s1882
      $region64: #{attention_forward.1} parent=59 // pred_fallthru
        _
      // Predicated region
      $region65: #{attention_forward.1} parent=59 // pred_check
        %p1884 = pneg %p211
      $region66: #{attention_forward.1} parent=59 // pred_check_branch
        %1886 = sbr.rel (%p1884) target = $region68
      $region67: #{attention_forward.1} parent=59 // pred_region
        %p1887 = scmp.lt.s32.totalorder %s21, 1
        %s1888 = scalar_select %p1887, %s21, 1
        %s1889 = smul.addr %s1888, 16
        %s1890 = smul.addr %s1889, 8
        %s1891 = scalar_lea.vmem %s7, %s1890
      $region68: #{attention_forward.1} parent=59 // pred_fallthru
        _
      // Predicated region
      $region69: #{attention_forward.1} parent=59 // pred_check
        %p1892 = pneg %p237
      $region70: #{attention_forward.1} parent=59 // pred_check_branch
        %1894 = sbr.rel (%p1892) target = $region72
      $region71: #{attention_forward.1} parent=59 // pred_region
        %p1895 = scmp.lt.s32.totalorder %s21, 1
        %s1896 = scalar_select %p1895, %s21, 1
        %s1897 = smul.addr %s1896, 8
        %s1898 = smul.addr %s1897, 8
        %s1899 = scalar_lea.vmem %s8, %s1898
      $region72: #{attention_forward.1} parent=59 // pred_fallthru
        _
    $region60: #{attention_forward.1} parent=5 // pred_fallthru
      _
  $region6: #{attention_forward.1} parent=0 // loop_footer
    %s19 = sadd.s32 1, %s15
  $region7: #{attention_forward.1} parent=0 // loop_footer_branch
    %14 = sbr.rel target = $region3
  $region8: #{attention_forward.1} parent=0 // loop_exit
    _

</llo_original>
